<compile_context>
chip_gen: v7x
topology: tpu7x:2x2x1
jax: 0.10.0
libtpu: 0.0.40
codegen_flags: <defaults>
</compile_context>

<pallas_src>
import numpy as np
import jax
import jax.numpy as jnp
from jax.experimental import pallas as pl
from jax.experimental.pallas import tpu as pltpu


# ---------------------------------------------------------------------------
# In-kernel helpers
# ---------------------------------------------------------------------------
def _erf(x):
    # Abramowitz & Stegun 7.1.26 polynomial erf approximation (|err| <= 1.5e-7).
    a1, a2, a3, a4, a5 = 0.254829592, -0.284496736, 1.421413741, -1.453152027, 1.061405429
    p = 0.3275911
    ax = jnp.abs(x)
    # NOTE: if a profile ever shows VALU as the binding slot, switch this divide to
    # pl.reciprocal(1.0 + p * ax, approx=True) to move it onto the EUP slot.
    t = 1.0 / (1.0 + p * ax)
    poly = ((((a5 * t + a4) * t + a3) * t + a2) * t + a1) * t
    e = 1.0 - poly * jnp.exp(-ax * ax)
    return jnp.where(x >= 0, e, -e)


def _gelu_exact(x):
    return 0.5 * x * (1.0 + _erf(x * 0.7071067811865476))


# ---------------------------------------------------------------------------
# Kernel 1: 3x3 conv (3 accumulating K=3*Cin matmuls) + folded BN + GELU
#   x_ref:     (1, 1, (TH+2)*W, 3*Cin)  horizontally tap-expanded rows with a 1-row halo
#                                       above/below, rows flattened as y*W + x.
#   w_ref:     (3, 3*Cin, Cout)         conv weight, vertical-tap major.
#   scale_ref: (1, Cout)                gamma / sqrt(var + eps)
#   shift_ref: (1, Cout)                beta + scale * (conv_bias - mean)
#   o_ref:     (1, TH*W, Cout)
# ---------------------------------------------------------------------------
def conv_bn_gelu_kernel(x_ref, w_ref, scale_ref, shift_ref, o_ref):
    rows = o_ref.shape[1]                   # TH * W
    w_img = (x_ref.shape[2] - rows) // 2    # W (halo is exactly 2 image rows)
    cout = w_ref.shape[2]

    acc = jnp.zeros((rows, cout), jnp.float32)
    for dy in range(3):  # static unroll: each vertical tap is an 8-aligned sublane slice
        lhs = x_ref[0, 0, dy * w_img: dy * w_img + rows, :]
        acc = acc + jnp.dot(lhs, w_ref[dy], preferred_element_type=jnp.float32)

    y = acc * scale_ref[...] + shift_ref[...]
    o_ref[0] = _gelu_exact(y).astype(o_ref.dtype)


# ---------------------------------------------------------------------------
# Kernel 2: patchify conv as a row-tiled matmul + bias
#   x_ref: (TM2, P*P*Cout)   flattened non-overlapping patches (lane-dense K)
#   w_ref: (P*P*Cout, Cout)
#   b_ref: (1, Cout)
#   o_ref: (TM2, Cout)
# ---------------------------------------------------------------------------
def patch_matmul_kernel(x_ref, w_ref, b_ref, o_ref):
    o_ref[...] = (
        jnp.dot(x_ref[...], w_ref[...], preferred_element_type=jnp.float32) + b_ref[...]
    ).astype(o_ref.dtype)


# ---------------------------------------------------------------------------
# Wrapper helpers
# ---------------------------------------------------------------------------
def _round_up(x, m):
    return (x + m - 1) // m * m


def _pick_tile_rows(H, W, target_rows=1024):
    # Largest row tile (multiple of 8 image rows) whose flattened row count is around
    # `target_rows`; per-grid-step overhead is only ~0.35us, so err on the large side.
    th = max(8, (target_rows // max(W, 1)) // 8 * 8)
    th = min(th, _round_up(H, 8))
    return th


def _vmem_limit(nbytes):
    # Double-buffered blocks + slack; clamp to a budget that is safe on v5e (16 MiB scoped
    # default), v6e (32 MiB default / 128 MiB physical) and v7x (32 MiB / 64 MiB physical).
    return int(min(max(3 * nbytes, 8 * 2 ** 20), 32 * 2 ** 20))


# ---------------------------------------------------------------------------
# Wrapper
# ---------------------------------------------------------------------------
def patchify_stem(x_nchw, conv_w, conv_b, gamma, beta, run_mean, run_var,
                  patch_w, patch_b, *, patch_size=4, eps=1e-5,
                  compute_dtype=jnp.float32):
    N, Cin, H, W = x_nchw.shape
    Cout = conv_w.shape[0]
    P = patch_size
    Ho, Wo = H // P, W // P
    assert W % 8 == 0, "W must be a multiple of 8 for sublane-aligned row flattening"
    # TODO(synk): pad W up to a multiple of 8 for odd widths instead of asserting.

    cdt = compute_dtype
    itemsize = jnp.dtype(cdt).itemsize

    # ---- glue (plain XLA): NCHW -> NHWC, pad, horizontal tap expansion ----------
    x = jnp.transpose(x_nchw, (0, 2, 3, 1))                    # NHWC
    xp = jnp.pad(x, ((0, 0), (1, 1), (1, 1), (0, 0)))          # conv padding = 1
    # 3 horizontal taps stacked onto the channel dim: (N, H+2, W, 3*Cin).  Only a 3x copy
    # of the tiny Cin axis; vertical taps are built in-VMEM inside the kernel, so there is
    # no 9x im2col in HBM.
    xh = jnp.concatenate([xp[:, :, dx:dx + W, :] for dx in range(3)], axis=-1)

    # Row tiles (grid axis 1) with a 2-row halo each; rows flattened to y*W + x.
    TH = _pick_tile_rows(H, W)
    n_tiles = -(-H // TH)
    h_pad = n_tiles * TH + 2
    xh = jnp.pad(xh, ((0, 0), (0, h_pad - (H + 2)), (0, 0), (0, 0)))
    xt = jnp.stack([xh[:, t * TH:t * TH + TH + 2] for t in range(n_tiles)], axis=1)
    xt = xt.reshape(N, n_tiles, (TH + 2) * W, 3 * Cin).astype(cdt)

    # Conv weight, vertical-tap major: w_taps[dy, dx*Cin + ci, co] = conv_w[co, ci, dy, dx]
    w_taps = jnp.transpose(conv_w, (2, 3, 1, 0)).reshape(3, 3 * Cin, Cout).astype(cdt)

    # Fold BN (inference, running stats) + conv bias into per-channel scale/shift (f32).
    scale = gamma / jnp.sqrt(run_var + eps)
    shift = beta + scale * (conv_b - run_mean)
    scale2 = scale.reshape(1, Cout).astype(jnp.float32)
    shift2 = shift.reshape(1, Cout).astype(jnp.float32)

    in_block = (TH + 2) * W * 3 * Cin * itemsize
    out_block = TH * W * Cout * 4
    w_bytes = 9 * Cin * Cout * itemsize

    # ---- kernel 1: conv3x3 + BN + GELU, grid over (batch, row tiles) ------------
    y = pl.pallas_call(
        conv_bn_gelu_kernel,
        out_shape=jax.ShapeDtypeStruct((N, n_tiles * TH * W, Cout), jnp.float32),
        grid=(N, n_tiles),
        in_specs=[
            pl.BlockSpec((1, 1, (TH + 2) * W, 3 * Cin), lambda n, t: (n, t, 0, 0)),
            pl.BlockSpec((3, 3 * Cin, Cout), lambda n, t: (0, 0, 0)),
            pl.BlockSpec((1, Cout), lambda n, t: (0, 0)),
            pl.BlockSpec((1, Cout), lambda n, t: (0, 0)),
        ],
        out_specs=pl.BlockSpec((1, TH * W, Cout), lambda n, t: (n, t, 0)),
        compiler_params=pltpu.CompilerParams(
            dimension_semantics=("parallel", "parallel"),
            vmem_limit_bytes=_vmem_limit(in_block + out_block + w_bytes),
        ),
    )(xt, w_taps, scale2, shift2)
    y = y[:, :H * W, :]                                        # drop padded tail rows

    # ---- glue: gather non-overlapping PxP patches (single XLA transpose) --------
    # TODO(synk): fuse this regroup into the Pallas kernels (lane-dense output) once
    #             Mosaic handles the (W, Cout) -> (Wo, P*Cout) minor-dim reshape robustly.
    y6 = y.reshape(N, Ho, P, Wo, P, Cout).transpose(0, 1, 3, 2, 4, 5)
    K2 = P * P * Cout
    patches = y6.reshape(N * Ho * Wo, K2).astype(cdt)          # (M, K2), K2 is lane-dense
    w2 = jnp.transpose(patch_w, (2, 3, 1, 0)).reshape(K2, Cout).astype(cdt)
    b2 = patch_b.reshape(1, Cout).astype(jnp.float32)

    M = patches.shape[0]
    TM2 = min(512, _round_up(M, 8))
    m_pad = _round_up(M, TM2)
    patches = jnp.pad(patches, ((0, m_pad - M), (0, 0)))

    lhs_block = TM2 * K2 * itemsize
    rhs_block = K2 * Cout * itemsize
    out2_block = TM2 * Cout * 4

    # ---- kernel 2: patchify matmul + bias, tiled over rows ----------------------
    out = pl.pallas_call(
        patch_matmul_kernel,
        out_shape=jax.ShapeDtypeStruct((m_pad, Cout), jnp.float32),
        grid=(m_pad // TM2,),
        in_specs=[
            pl.BlockSpec((TM2, K2), lambda i: (i, 0)),
            pl.BlockSpec((K2, Cout), lambda i: (0, 0)),
            pl.BlockSpec((1, Cout), lambda i: (0, 0)),
        ],
        out_specs=pl.BlockSpec((TM2, Cout), lambda i: (i, 0)),
        compiler_params=pltpu.CompilerParams(
            dimension_semantics=("parallel",),
            vmem_limit_bytes=_vmem_limit(lhs_block + rhs_block + out2_block),
        ),
    )(patches, w2, b2)

    out = out[:M].reshape(N, Ho, Wo, Cout).transpose(0, 3, 1, 2)   # back to NCHW
    return out


# ---------------------------------------------------------------------------
# Pure-JAX reference (mirrors PyTorch semantics, NCHW)
# ---------------------------------------------------------------------------
def ref_forward(x, conv_w, conv_b, gamma, beta, run_mean, run_var,
                patch_w, patch_b, *, patch_size=4, eps=1e-5):
    y = jax.lax.conv_general_dilated(
        x, conv_w, window_strides=(1, 1), padding=((1, 1), (1, 1)),
        dimension_numbers=("NCHW", "OIHW", "NCHW"))
    y = y + conv_b[None, :, None, None]
    y = (y - run_mean[None, :, None, None]) / jnp.sqrt(run_var + eps)[None, :, None, None]
    y = y * gamma[None, :, None, None] + beta[None, :, None, None]
    y = jax.nn.gelu(y, approximate=False)
    y = jax.lax.conv_general_dilated(
        y, patch_w, window_strides=(patch_size, patch_size), padding="VALID",
        dimension_numbers=("NCHW", "OIHW", "NCHW"))
    y = y + patch_b[None, :, None, None]
    return y


# ---------------------------------------------------------------------------
if __name__ == "__main__":
    key = jax.random.PRNGKey(0)
    ks = jax.random.split(key, 8)

    N, Cin, H, W, Cout, P = 2, 4, 16, 16, 32, 4

    x = jax.random.normal(ks[0], (N, Cin, H, W), jnp.float32)

    # Deterministic synthetic parameters (PyTorch layouts).
    conv_w = 0.2 * jax.random.normal(ks[1], (Cout, Cin, 3, 3), jnp.float32)
    conv_b = 0.1 * jax.random.normal(ks[2], (Cout,), jnp.float32)
    gamma = 1.0 + 0.1 * jax.random.normal(ks[3], (Cout,), jnp.float32)
    beta = 0.1 * jax.random.normal(ks[4], (Cout,), jnp.float32)
    run_mean = jnp.zeros((Cout,), jnp.float32)
    run_var = jnp.ones((Cout,), jnp.float32)
    patch_w = 0.05 * jax.random.normal(ks[5], (Cout, Cout, P, P), jnp.float32)
    patch_b = 0.1 * jax.random.normal(ks[6], (Cout,), jnp.float32)

    args = (x, conv_w, conv_b, gamma, beta, run_mean, run_var, patch_w, patch_b)

    ref = jax.block_until_ready(ref_forward(*args, patch_size=P))

    # f32 path: matches the PyTorch module to f32 noise.
    fn32 = jax.jit(lambda *a: patchify_stem(*a, patch_size=P))
    out32 = jax.block_until_ready(fn32(*args))
    assert out32.shape == (N, Cout, H // P, W // P), out32.shape
    np.testing.assert_allclose(np.asarray(out32), np.asarray(ref), rtol=2e-3, atol=2e-3)

    # bf16 MXU-input path (v6e/v7x perf feedback): f32 accumulation + f32 epilogue.
    fnbf = jax.jit(lambda *a: patchify_stem(*a, patch_size=P,
                                            compute_dtype=jnp.bfloat16))
    outbf = jax.block_until_ready(fnbf(*args))
    np.testing.assert_allclose(np.asarray(outbf), np.asarray(ref), rtol=2e-2, atol=2e-2)

    print("KERNEL_OK")
</pallas_src>

<mosaic_0001>
module attributes {stable_mosaic.version = 11 : i64} {
  func.func @conv_bn_gelu_kernel(%arg0: i32, %arg1: i32, %arg2: memref<1x1x288x12xf32, #tpu.memory_space<vmem>>, %arg3: memref<3x12x32xf32, #tpu.memory_space<vmem>>, %arg4: memref<1x32xf32, #tpu.memory_space<vmem>>, %arg5: memref<1x32xf32, #tpu.memory_space<vmem>>, %arg6: memref<1x256x32xf32, #tpu.memory_space<vmem>>) attributes {dimension_semantics = [#tpu.dimension_semantics<parallel>, #tpu.dimension_semantics<parallel>], iteration_bounds = array<i64: 2, 1>, scalar_prefetch = 0 : i64, scratch_operands = 0 : i64, tpu.core_type = #tpu.core_type<tc>, window_params = [{transform_indices = @transform_0, window_bounds = array<i64: 1, 1, 288, 12>}, {pipeline_mode = #tpu.pipeline_mode<synchronous>, transform_indices = @transform_1, window_bounds = array<i64: 3, 12, 32>}, {pipeline_mode = #tpu.pipeline_mode<synchronous>, transform_indices = @transform_2, window_bounds = array<i64: 1, 32>}, {pipeline_mode = #tpu.pipeline_mode<synchronous>, transform_indices = @transform_3, window_bounds = array<i64: 1, 32>}, {transform_indices = @transform_4, window_bounds = array<i64: 1, 256, 32>}]} {
    %cst = arith.constant 0.000000e+00 : f32
    %0 = vector.broadcast %cst : f32 to vector<256x32xf32>
    %c0 = arith.constant 0 : index
    %c0_0 = arith.constant 0 : index
    %c0_1 = arith.constant 0 : index
    %c0_2 = arith.constant 0 : index
    %1 = vector.load %arg2[%c0, %c0_0, %c0_1, %c0_2] : memref<1x1x288x12xf32, #tpu.memory_space<vmem>>, vector<1x1x256x12xf32>
    %2 = vector.shape_cast %1 : vector<1x1x256x12xf32> to vector<256x12xf32>
    %c0_3 = arith.constant 0 : index
    %c0_4 = arith.constant 0 : index
    %c0_5 = arith.constant 0 : index
    %3 = vector.load %arg3[%c0_3, %c0_4, %c0_5] : memref<3x12x32xf32, #tpu.memory_space<vmem>>, vector<1x12x32xf32>
    %4 = vector.shape_cast %3 : vector<1x12x32xf32> to vector<12x32xf32>
    %cst_6 = arith.constant dense<0.000000e+00> : vector<256x32xf32>
    %5 = tpu.matmul %2, %4, %cst_6 {dimension_numbers = #tpu.dot_dimension_numbers<[1], [0], [0], [1], [0, 0, 1, 1], [], []>} : vector<256x12xf32>, vector<12x32xf32>, vector<256x32xf32> -> vector<256x32xf32>
    %6 = arith.addf %0, %5 : vector<256x32xf32>
    %c0_7 = arith.constant 0 : index
    %c0_8 = arith.constant 0 : index
    %c16 = arith.constant 16 : index
    %c0_9 = arith.constant 0 : index
    %7 = vector.load %arg2[%c0_7, %c0_8, %c16, %c0_9] : memref<1x1x288x12xf32, #tpu.memory_space<vmem>>, vector<1x1x256x12xf32>
    %8 = vector.shape_cast %7 : vector<1x1x256x12xf32> to vector<256x12xf32>
    %c1 = arith.constant 1 : index
    %c0_10 = arith.constant 0 : index
    %c0_11 = arith.constant 0 : index
    %9 = vector.load %arg3[%c1, %c0_10, %c0_11] : memref<3x12x32xf32, #tpu.memory_space<vmem>>, vector<1x12x32xf32>
    %10 = vector.shape_cast %9 : vector<1x12x32xf32> to vector<12x32xf32>
    %cst_12 = arith.constant dense<0.000000e+00> : vector<256x32xf32>
    %11 = tpu.matmul %8, %10, %cst_12 {dimension_numbers = #tpu.dot_dimension_numbers<[1], [0], [0], [1], [0, 0, 1, 1], [], []>} : vector<256x12xf32>, vector<12x32xf32>, vector<256x32xf32> -> vector<256x32xf32>
    %12 = arith.addf %6, %11 : vector<256x32xf32>
    %c0_13 = arith.constant 0 : index
    %c0_14 = arith.constant 0 : index
    %c32 = arith.constant 32 : index
    %c0_15 = arith.constant 0 : index
    %13 = vector.load %arg2[%c0_13, %c0_14, %c32, %c0_15] : memref<1x1x288x12xf32, #tpu.memory_space<vmem>>, vector<1x1x256x12xf32>
    %14 = vector.shape_cast %13 : vector<1x1x256x12xf32> to vector<256x12xf32>
    %c2 = arith.constant 2 : index
    %c0_16 = arith.constant 0 : index
    %c0_17 = arith.constant 0 : index
    %15 = vector.load %arg3[%c2, %c0_16, %c0_17] : memref<3x12x32xf32, #tpu.memory_space<vmem>>, vector<1x12x32xf32>
    %16 = vector.shape_cast %15 : vector<1x12x32xf32> to vector<12x32xf32>
    %cst_18 = arith.constant dense<0.000000e+00> : vector<256x32xf32>
    %17 = tpu.matmul %14, %16, %cst_18 {dimension_numbers = #tpu.dot_dimension_numbers<[1], [0], [0], [1], [0, 0, 1, 1], [], []>} : vector<256x12xf32>, vector<12x32xf32>, vector<256x32xf32> -> vector<256x32xf32>
    %18 = arith.addf %12, %17 : vector<256x32xf32>
    %c0_19 = arith.constant 0 : index
    %c0_20 = arith.constant 0 : index
    %19 = vector.load %arg4[%c0_19, %c0_20] : memref<1x32xf32, #tpu.memory_space<vmem>>, vector<1x32xf32>
    %20 = vector.broadcast %19 : vector<1x32xf32> to vector<256x32xf32>
    %21 = arith.mulf %18, %20 : vector<256x32xf32>
    %c0_21 = arith.constant 0 : index
    %c0_22 = arith.constant 0 : index
    %22 = vector.load %arg5[%c0_21, %c0_22] : memref<1x32xf32, #tpu.memory_space<vmem>>, vector<1x32xf32>
    %23 = vector.broadcast %22 : vector<1x32xf32> to vector<256x32xf32>
    %24 = arith.addf %21, %23 : vector<256x32xf32>
    %cst_23 = arith.constant 5.000000e-01 : f32
    %25 = vector.broadcast %cst_23 : f32 to vector<256x32xf32>
    %26 = arith.mulf %25, %24 : vector<256x32xf32>
    %cst_24 = arith.constant 0.707106769 : f32
    %27 = vector.broadcast %cst_24 : f32 to vector<256x32xf32>
    %28 = arith.mulf %24, %27 : vector<256x32xf32>
    %29 = math.absf %28 : vector<256x32xf32>
    %cst_25 = arith.constant 0.327591091 : f32
    %30 = vector.broadcast %cst_25 : f32 to vector<256x32xf32>
    %31 = arith.mulf %30, %29 : vector<256x32xf32>
    %cst_26 = arith.constant 1.000000e+00 : f32
    %32 = vector.broadcast %cst_26 : f32 to vector<256x32xf32>
    %33 = arith.addf %32, %31 : vector<256x32xf32>
    %cst_27 = arith.constant 1.000000e+00 : f32
    %34 = vector.broadcast %cst_27 : f32 to vector<256x32xf32>
    %35 = arith.divf %34, %33 : vector<256x32xf32>
    %cst_28 = arith.constant 1.06140542 : f32
    %36 = vector.broadcast %cst_28 : f32 to vector<256x32xf32>
    %37 = arith.mulf %36, %35 : vector<256x32xf32>
    %cst_29 = arith.constant -1.45315206 : f32
    %38 = vector.broadcast %cst_29 : f32 to vector<256x32xf32>
    %39 = arith.addf %37, %38 : vector<256x32xf32>
    %40 = arith.mulf %39, %35 : vector<256x32xf32>
    %cst_30 = arith.constant 1.42141378 : f32
    %41 = vector.broadcast %cst_30 : f32 to vector<256x32xf32>
    %42 = arith.addf %40, %41 : vector<256x32xf32>
    %43 = arith.mulf %42, %35 : vector<256x32xf32>
    %cst_31 = arith.constant -0.284496725 : f32
    %44 = vector.broadcast %cst_31 : f32 to vector<256x32xf32>
    %45 = arith.addf %43, %44 : vector<256x32xf32>
    %46 = arith.mulf %45, %35 : vector<256x32xf32>
    %cst_32 = arith.constant 0.254829586 : f32
    %47 = vector.broadcast %cst_32 : f32 to vector<256x32xf32>
    %48 = arith.addf %46, %47 : vector<256x32xf32>
    %49 = arith.mulf %48, %35 : vector<256x32xf32>
    %cst_33 = arith.constant 0.000000e+00 : f32
    %50 = vector.broadcast %cst_33 : f32 to vector<256x32xf32>
    %51 = arith.subf %50, %29 : vector<256x32xf32>
    %52 = arith.mulf %51, %29 : vector<256x32xf32>
    %53 = math.exp %52 : vector<256x32xf32>
    %54 = arith.mulf %49, %53 : vector<256x32xf32>
    %cst_34 = arith.constant 1.000000e+00 : f32
    %55 = vector.broadcast %cst_34 : f32 to vector<256x32xf32>
    %56 = arith.subf %55, %54 : vector<256x32xf32>
    %cst_35 = arith.constant 0.000000e+00 : f32
    %57 = vector.broadcast %cst_35 : f32 to vector<256x32xf32>
    %58 = arith.cmpf oge, %28, %57 : vector<256x32xf32>
    %cst_36 = arith.constant 0.000000e+00 : f32
    %59 = vector.broadcast %cst_36 : f32 to vector<256x32xf32>
    %60 = arith.subf %59, %56 : vector<256x32xf32>
    %61 = arith.select %58, %56, %60 : vector<256x32xi1>, vector<256x32xf32>
    %cst_37 = arith.constant 1.000000e+00 : f32
    %62 = vector.broadcast %cst_37 : f32 to vector<256x32xf32>
    %63 = arith.addf %62, %61 : vector<256x32xf32>
    %64 = arith.mulf %26, %63 : vector<256x32xf32>
    %c0_38 = arith.constant 0 : index
    %c0_39 = arith.constant 0 : index
    %c0_40 = arith.constant 0 : index
    %65 = vector.load %arg6[%c0_38, %c0_39, %c0_40] : memref<1x256x32xf32, #tpu.memory_space<vmem>>, vector<1x256x32xf32>
    %66 = vector.shape_cast %65 : vector<1x256x32xf32> to vector<256x32xf32>
    %67 = vector.shape_cast %64 : vector<256x32xf32> to vector<1x256x32xf32>
    tpu.vector_store %arg6[%c0_38, %c0_39, %c0_40], %67 {strides = array<i32>} : memref<1x256x32xf32, #tpu.memory_space<vmem>>, vector<1x256x32xf32>,
    return
  }
  func.func @transform_0(%arg0: i32, %arg1: i32) -> (i32, i32, i32, i32) {
    %c0_i32 = arith.constant 0 : i32
    %c0_i32_0 = arith.constant 0 : i32
    %c0_i32_1 = arith.constant 0 : i32
    return %arg0, %arg1, %c0_i32, %c0_i32_0 : i32, i32, i32, i32
  }
  func.func @transform_1(%arg0: i32, %arg1: i32) -> (i32, i32, i32) {
    %c0_i32 = arith.constant 0 : i32
    %c0_i32_0 = arith.constant 0 : i32
    %c0_i32_1 = arith.constant 0 : i32
    %c0_i32_2 = arith.constant 0 : i32
    return %c0_i32, %c0_i32_0, %c0_i32_1 : i32, i32, i32
  }
  func.func @transform_2(%arg0: i32, %arg1: i32) -> (i32, i32) {
    %c0_i32 = arith.constant 0 : i32
    %c0_i32_0 = arith.constant 0 : i32
    %c0_i32_1 = arith.constant 0 : i32
    return %c0_i32, %c0_i32_0 : i32, i32
  }
  func.func @transform_3(%arg0: i32, %arg1: i32) -> (i32, i32) {
    %c0_i32 = arith.constant 0 : i32
    %c0_i32_0 = arith.constant 0 : i32
    %c0_i32_1 = arith.constant 0 : i32
    return %c0_i32, %c0_i32_0 : i32, i32
  }
  func.func @transform_4(%arg0: i32, %arg1: i32) -> (i32, i32, i32) {
    %c0_i32 = arith.constant 0 : i32
    %c0_i32_0 = arith.constant 0 : i32
    return %arg0, %arg1, %c0_i32 : i32, i32, i32
  }
}

module attributes {stable_mosaic.version = 11 : i64} {
  func.func @patch_matmul_kernel(%arg0: i32, %arg1: memref<32x512xf32, #tpu.memory_space<vmem>>, %arg2: memref<512x32xf32, #tpu.memory_space<vmem>>, %arg3: memref<1x32xf32, #tpu.memory_space<vmem>>, %arg4: memref<32x32xf32, #tpu.memory_space<vmem>>) attributes {dimension_semantics = [#tpu.dimension_semantics<parallel>], iteration_bounds = array<i64: 1>, scalar_prefetch = 0 : i64, scratch_operands = 0 : i64, tpu.core_type = #tpu.core_type<tc>, window_params = [{transform_indices = @transform_0, window_bounds = array<i64: 32, 512>}, {pipeline_mode = #tpu.pipeline_mode<synchronous>, transform_indices = @transform_1, window_bounds = array<i64: 512, 32>}, {pipeline_mode = #tpu.pipeline_mode<synchronous>, transform_indices = @transform_2, window_bounds = array<i64: 1, 32>}, {transform_indices = @transform_3, window_bounds = array<i64: 32, 32>}]} {
    %c0 = arith.constant 0 : index
    %c0_0 = arith.constant 0 : index
    %0 = vector.load %arg1[%c0, %c0_0] : memref<32x512xf32, #tpu.memory_space<vmem>>, vector<32x512xf32>
    %c0_1 = arith.constant 0 : index
    %c0_2 = arith.constant 0 : index
    %1 = vector.load %arg2[%c0_1, %c0_2] : memref<512x32xf32, #tpu.memory_space<vmem>>, vector<512x32xf32>
    %cst = arith.constant dense<0.000000e+00> : vector<32x32xf32>
    %2 = tpu.matmul %0, %1, %cst {dimension_numbers = #tpu.dot_dimension_numbers<[1], [0], [0], [1], [0, 0, 1, 1], [], []>} : vector<32x512xf32>, vector<512x32xf32>, vector<32x32xf32> -> vector<32x32xf32>
    %c0_3 = arith.constant 0 : index
    %c0_4 = arith.constant 0 : index
    %3 = vector.load %arg3[%c0_3, %c0_4] : memref<1x32xf32, #tpu.memory_space<vmem>>, vector<1x32xf32>
    %4 = vector.broadcast %3 : vector<1x32xf32> to vector<32x32xf32>
    %5 = arith.addf %2, %4 : vector<32x32xf32>
    %c0_5 = arith.constant 0 : index
    %c0_6 = arith.constant 0 : index
    %6 = vector.load %arg4[%c0_5, %c0_6] : memref<32x32xf32, #tpu.memory_space<vmem>>, vector<32x32xf32>
    tpu.vector_store %arg4[%c0_5, %c0_6], %5 {strides = array<i32>} : memref<32x32xf32, #tpu.memory_space<vmem>>, vector<32x32xf32>,
    return
  }
  func.func @transform_0(%arg0: i32) -> (i32, i32) {
    %c0_i32 = arith.constant 0 : i32
    %c0_i32_0 = arith.constant 0 : i32
    return %arg0, %c0_i32 : i32, i32
  }
  func.func @transform_1(%arg0: i32) -> (i32, i32) {
    %c0_i32 = arith.constant 0 : i32
    %c0_i32_0 = arith.constant 0 : i32
    %c0_i32_1 = arith.constant 0 : i32
    return %c0_i32, %c0_i32_0 : i32, i32
  }
  func.func @transform_2(%arg0: i32) -> (i32, i32) {
    %c0_i32 = arith.constant 0 : i32
    %c0_i32_0 = arith.constant 0 : i32
    %c0_i32_1 = arith.constant 0 : i32
    return %c0_i32, %c0_i32_0 : i32, i32
  }
  func.func @transform_3(%arg0: i32) -> (i32, i32) {
    %c0_i32 = arith.constant 0 : i32
    %c0_i32_0 = arith.constant 0 : i32
    return %arg0, %c0_i32 : i32, i32
  }
}

</mosaic_0001>

<llo_original>
// kernel: _lambda_.3
$region0: #{_lambda_.3}
  #allocation0 [shape = 'u32[]', space=smem, size = 0x4, offset = 0x4, fixed_abs, tag = 'smem constant byte address 0x4 - core index']
  #allocation1 [shape = 'u32[144,128]{1,0:T(1,128)}', space=vmem, size = 0x12000, scoped, tag = 'internal scratch']
  %s0 = inlined_call_operand.vmem [shape: f32[32,512], index: 0, kind: input, shape index: {}]
  %s1 = inlined_call_operand.vmem [shape: f32[512,32], index: 1, kind: input, shape index: {}]
  %s2 = inlined_call_operand.vmem [shape: f32[1,32], index: 2, kind: input, shape index: {}]
  %s3 = inlined_call_operand.hbm [shape: f32[32,32], index: 3, kind: output, shape index: {}]
  %s4 = sld [smem:[#allocation0]]
  $region22: #{_lambda_.3} parent=0
    _
  %s6 = ssub.s32 1, %s4
  %s7 = scalar_select 0, %s6, %s4
  $region1: #{_lambda_.3} parent=0
    #allocation2 [shape = 'u8[16384]{0}', space=vmem, size = 0x4000, scoped, tag = 'output window, operand 0, single buffered']
    #allocation3 [shape = 's32[1]{0}', space=sflag, size = 0x4, scoped, tag = 'scoped memory for _lambda_.3']
    %8 = vsyncpa [#allocation3], 0
    // Predicated region
    $region2: #{_lambda_.3} parent=1 // pred_check
      _
    $region3: #{_lambda_.3} parent=1 // pred_check_branch
      %10 = sbr.rel (0) target = $region5
    $region4: #{_lambda_.3} parent=1 // pred_region
      _
    $region5: #{_lambda_.3} parent=1 // pred_fallthru
      _
    // Predicated region
    $region6: #{_lambda_.3} parent=1 // pred_check
      _
    $region7: #{_lambda_.3} parent=1 // pred_check_branch
      %12 = sbr.rel (0) target = $region9
    $region8: #{_lambda_.3} parent=1 // pred_region
      _
    $region9: #{_lambda_.3} parent=1 // pred_fallthru
      _
    // Predicated region
    $region10: #{_lambda_.3} parent=1 // pred_check
      _
    $region11: #{_lambda_.3} parent=1 // pred_check_branch
      %14 = sbr.rel (0) target = $region13
    $region12: #{_lambda_.3} parent=1 // pred_region
      _
    $region13: #{_lambda_.3} parent=1 // pred_fallthru
      _
    %v15 = vld [vmem:[%s0] sm:$0xff]
    %v16 = vld [vmem:[%s0 + $0x8] sm:$0xff]
    %v17 = vld [vmem:[%s0 + $0x10] sm:$0xff]
    %v18 = vld [vmem:[%s0 + $0x18] sm:$0xff]
    %v19 = vld [vmem:[%s0 + $0x20] sm:$0xff]
    %v20 = vld [vmem:[%s0 + $0x28] sm:$0xff]
    %v21 = vld [vmem:[%s0 + $0x30] sm:$0xff]
    %v22 = vld [vmem:[%s0 + $0x38] sm:$0xff]
    %v23 = vld [vmem:[%s0 + $0x40] sm:$0xff]
    %v24 = vld [vmem:[%s0 + $0x48] sm:$0xff]
    %v25 = vld [vmem:[%s0 + $0x50] sm:$0xff]
    %v26 = vld [vmem:[%s0 + $0x58] sm:$0xff]
    %v27 = vld [vmem:[%s0 + $0x60] sm:$0xff]
    %v28 = vld [vmem:[%s0 + $0x68] sm:$0xff]
    %v29 = vld [vmem:[%s0 + $0x70] sm:$0xff]
    %v30 = vld [vmem:[%s0 + $0x78] sm:$0xff]
    %v31 = vld [vmem:[%s1] sm:$0xff]
    %v32 = vld [vmem:[%s1 + $0x8] sm:$0xff]
    %v33 = vld [vmem:[%s1 + $0x10] sm:$0xff]
    %v34 = vld [vmem:[%s1 + $0x18] sm:$0xff]
    %v35 = vld [vmem:[%s1 + $0x20] sm:$0xff]
    %v36 = vld [vmem:[%s1 + $0x28] sm:$0xff]
    %v37 = vld [vmem:[%s1 + $0x30] sm:$0xff]
    %v38 = vld [vmem:[%s1 + $0x38] sm:$0xff]
    %v39 = vld [vmem:[%s1 + $0x40] sm:$0xff]
    %v40 = vld [vmem:[%s1 + $0x48] sm:$0xff]
    %v41 = vld [vmem:[%s1 + $0x50] sm:$0xff]
    %v42 = vld [vmem:[%s1 + $0x58] sm:$0xff]
    %v43 = vld [vmem:[%s1 + $0x60] sm:$0xff]
    %v44 = vld [vmem:[%s1 + $0x68] sm:$0xff]
    %v45 = vld [vmem:[%s1 + $0x70] sm:$0xff]
    %v46 = vld [vmem:[%s1 + $0x78] sm:$0xff]
    %v47 = vld [vmem:[%s1 + $0x80] sm:$0xff]
    %v48 = vld [vmem:[%s1 + $0x88] sm:$0xff]
    %v49 = vld [vmem:[%s1 + $0x90] sm:$0xff]
    %v50 = vld [vmem:[%s1 + $0x98] sm:$0xff]
    %v51 = vld [vmem:[%s1 + $0xa0] sm:$0xff]
    %v52 = vld [vmem:[%s1 + $0xa8] sm:$0xff]
    %v53 = vld [vmem:[%s1 + $0xb0] sm:$0xff]
    %v54 = vld [vmem:[%s1 + $0xb8] sm:$0xff]
    %v55 = vld [vmem:[%s1 + $0xc0] sm:$0xff]
    %v56 = vld [vmem:[%s1 + $0xc8] sm:$0xff]
    %v57 = vld [vmem:[%s1 + $0xd0] sm:$0xff]
    %v58 = vld [vmem:[%s1 + $0xd8] sm:$0xff]
    %v59 = vld [vmem:[%s1 + $0xe0] sm:$0xff]
    %v60 = vld [vmem:[%s1 + $0xe8] sm:$0xff]
    %v61 = vld [vmem:[%s1 + $0xf0] sm:$0xff]
    %v62 = vld [vmem:[%s1 + $0xf8] sm:$0xff]
    %v63 = vld [vmem:[%s1 + $0x100] sm:$0xff]
    %v64 = vld [vmem:[%s1 + $0x108] sm:$0xff]
    %v65 = vld [vmem:[%s1 + $0x110] sm:$0xff]
    %v66 = vld [vmem:[%s1 + $0x118] sm:$0xff]
    %v67 = vld [vmem:[%s1 + $0x120] sm:$0xff]
    %v68 = vld [vmem:[%s1 + $0x128] sm:$0xff]
    %v69 = vld [vmem:[%s1 + $0x130] sm:$0xff]
    %v70 = vld [vmem:[%s1 + $0x138] sm:$0xff]
    %v71 = vld [vmem:[%s1 + $0x140] sm:$0xff]
    %v72 = vld [vmem:[%s1 + $0x148] sm:$0xff]
    %v73 = vld [vmem:[%s1 + $0x150] sm:$0xff]
    %v74 = vld [vmem:[%s1 + $0x158] sm:$0xff]
    %v75 = vld [vmem:[%s1 + $0x160] sm:$0xff]
    %v76 = vld [vmem:[%s1 + $0x168] sm:$0xff]
    %v77 = vld [vmem:[%s1 + $0x170] sm:$0xff]
    %v78 = vld [vmem:[%s1 + $0x178] sm:$0xff]
    %v79 = vld [vmem:[%s1 + $0x180] sm:$0xff]
    %v80 = vld [vmem:[%s1 + $0x188] sm:$0xff]
    %v81 = vld [vmem:[%s1 + $0x190] sm:$0xff]
    %v82 = vld [vmem:[%s1 + $0x198] sm:$0xff]
    %v83 = vld [vmem:[%s1 + $0x1a0] sm:$0xff]
    %v84 = vld [vmem:[%s1 + $0x1a8] sm:$0xff]
    %v85 = vld [vmem:[%s1 + $0x1b0] sm:$0xff]
    %v86 = vld [vmem:[%s1 + $0x1b8] sm:$0xff]
    %v87 = vld [vmem:[%s1 + $0x1c0] sm:$0xff]
    %v88 = vld [vmem:[%s1 + $0x1c8] sm:$0xff]
    %v89 = vld [vmem:[%s1 + $0x1d0] sm:$0xff]
    %v90 = vld [vmem:[%s1 + $0x1d8] sm:$0xff]
    %v91 = vld [vmem:[%s1 + $0x1e0] sm:$0xff]
    %v92 = vld [vmem:[%s1 + $0x1e8] sm:$0xff]
    %v93 = vld [vmem:[%s1 + $0x1f0] sm:$0xff]
    %v94 = vld [vmem:[%s1 + $0x1f8] sm:$0xff]
    %v95 = vld [vmem:[%s2] sm:$0x1]
    %v97 = vlaneseq
    %v98 = vshrl.u32 %v97, 7
    %v99 = vsub.s32 0, %v98
    %v100 = vrot.slane %v95, %v99
    %102 = vmatprep.subr.mxu0 0.0
    %103 = vmatpush1.msra.mxu0 %v31
    %104 = vmatprep.subr.mxu0 0.0
    %105 = vmatpush1.msra.mxu0 %v32
    %106 = vmatprep.subr.mxu0 0.0
    %107 = vmatpush1.msra.mxu0 %v33
    %108 = vmatprep.subr.mxu0 0.0
    %109 = vmatpush1.msra.mxu0 %v34
    %110 = vmatprep.subr.mxu0 0.0
    %111 = vmatpush1.msra.mxu0 %v35
    %112 = vmatprep.subr.mxu0 0.0
    %113 = vmatpush1.msra.mxu0 %v36
    %114 = vmatprep.subr.mxu0 0.0
    %115 = vmatpush1.msra.mxu0 %v37
    %116 = vmatprep.subr.mxu0 0.0
    %117 = vmatpush1.msra.mxu0 %v38
    %118 = vmatprep.subr.mxu0 0.0
    %119 = vmatpush1.msra.mxu0 %v39
    %120 = vmatprep.subr.mxu0 0.0
    %121 = vmatpush1.msra.mxu0 %v40
    %122 = vmatprep.subr.mxu0 0.0
    %123 = vmatpush1.msra.mxu0 %v41
    %124 = vmatprep.subr.mxu0 0.0
    %125 = vmatpush1.msra.mxu0 %v42
    %126 = vmatprep.subr.mxu0 0.0
    %127 = vmatpush1.msra.mxu0 %v43
    %128 = vmatprep.subr.mxu0 0.0
    %129 = vmatpush1.msra.mxu0 %v44
    %130 = vmatprep.subr.mxu0 0.0
    %131 = vmatpush1.msra.mxu0 %v45
    %132 = vmatprep.subr.mxu0 0.0
    %133 = vmatpush1.msra.mxu0 %v46
    %134 = vmatprep.subr.mxu0 0.0
    %135 = vmatpush1.msra.mxu0 %v47
    %136 = vmatprep.subr.mxu0 0.0
    %137 = vmatpush1.msra.mxu0 %v48
    %138 = vmatprep.subr.mxu0 0.0
    %139 = vmatpush1.msra.mxu0 %v49
    %140 = vmatprep.subr.mxu0 0.0
    %141 = vmatpush1.msra.mxu0 %v50
    %142 = vmatprep.subr.mxu0 0.0
    %143 = vmatpush1.msra.mxu0 %v51
    %144 = vmatprep.subr.mxu0 0.0
    %145 = vmatpush1.msra.mxu0 %v52
    %146 = vmatprep.subr.mxu0 0.0
    %147 = vmatpush1.msra.mxu0 %v53
    %148 = vmatprep.subr.mxu0 0.0
    %149 = vmatpush1.msra.mxu0 %v54
    %150 = vmatprep.subr.mxu0 0.0
    %151 = vmatpush1.msra.mxu0 %v55
    %152 = vmatprep.subr.mxu0 0.0
    %153 = vmatpush1.msra.mxu0 %v56
    %154 = vmatprep.subr.mxu0 0.0
    %155 = vmatpush1.msra.mxu0 %v57
    %156 = vmatprep.subr.mxu0 0.0
    %157 = vmatpush1.msra.mxu0 %v58
    %158 = vmatprep.subr.mxu0 0.0
    %159 = vmatpush1.msra.mxu0 %v59
    %160 = vmatprep.subr.mxu0 0.0
    %161 = vmatpush1.msra.mxu0 %v60
    %162 = vmatprep.subr.mxu0 0.0
    %163 = vmatpush1.msra.mxu0 %v61
    %164 = vmatprep.subr.mxu0 0.0
    %165 = vmatpush1.msra.mxu0 %v62
    %166 = vmatprep.mubr.f32.mxu0 %v16
    %167 = vmatmul.mubr.f32.gmra.mrb[0].mxu0 %v15
    %v168 = vpop.f32.mrb[0].mxu0
    %v169 = vadd.f32 %v100, %v168
    %v170 = vpop.f32.mrb[0].mxu0
    %171 = vmatprep.mubr.f32.mxu0 %v20
    %172 = vmatmul.mubr.f32.gmra.mrb[0].mxu0 %v19
    %v173 = vpop.f32.mrb[0].mxu0
    %v174 = vadd.f32 %v100, %v173
    %v175 = vpop.f32.mrb[0].mxu0
    %176 = vmatprep.mubr.f32.mxu0 %v24
    %177 = vmatmul.mubr.f32.gmra.mrb[0].mxu0 %v23
    %v178 = vpop.f32.mrb[0].mxu0
    %v179 = vadd.f32 %v100, %v178
    %v180 = vpop.f32.mrb[0].mxu0
    %181 = vmatprep.mubr.f32.mxu0 %v28
    %182 = vmatmul.mubr.f32.gmra.mrb[0].mxu0 %v27
    %v183 = vpop.f32.mrb[0].mxu0
    %v184 = vadd.f32 %v100, %v183
    %v185 = vpop.f32.mrb[0].mxu0
    %186 = vdwg.mxu0
    %187 = vmatprep.subr.mxu0 0.0
    %188 = vmatpush1.msra.mxu0 %v63
    %189 = vmatprep.subr.mxu0 0.0
    %190 = vmatpush1.msra.mxu0 %v64
    %191 = vmatprep.subr.mxu0 0.0
    %192 = vmatpush1.msra.mxu0 %v65
    %193 = vmatprep.subr.mxu0 0.0
    %194 = vmatpush1.msra.mxu0 %v66
    %195 = vmatprep.subr.mxu0 0.0
    %196 = vmatpush1.msra.mxu0 %v67
    %197 = vmatprep.subr.mxu0 0.0
    %198 = vmatpush1.msra.mxu0 %v68
    %199 = vmatprep.subr.mxu0 0.0
    %200 = vmatpush1.msra.mxu0 %v69
    %201 = vmatprep.subr.mxu0 0.0
    %202 = vmatpush1.msra.mxu0 %v70
    %203 = vmatprep.subr.mxu0 0.0
    %204 = vmatpush1.msra.mxu0 %v71
    %205 = vmatprep.subr.mxu0 0.0
    %206 = vmatpush1.msra.mxu0 %v72
    %207 = vmatprep.subr.mxu0 0.0
    %208 = vmatpush1.msra.mxu0 %v73
    %209 = vmatprep.subr.mxu0 0.0
    %210 = vmatpush1.msra.mxu0 %v74
    %211 = vmatprep.subr.mxu0 0.0
    %212 = vmatpush1.msra.mxu0 %v75
    %213 = vmatprep.subr.mxu0 0.0
    %214 = vmatpush1.msra.mxu0 %v76
    %215 = vmatprep.subr.mxu0 0.0
    %216 = vmatpush1.msra.mxu0 %v77
    %217 = vmatprep.subr.mxu0 0.0
    %218 = vmatpush1.msra.mxu0 %v78
    %219 = vmatprep.subr.mxu0 0.0
    %220 = vmatpush1.msra.mxu0 %v79
    %221 = vmatprep.subr.mxu0 0.0
    %222 = vmatpush1.msra.mxu0 %v80
    %223 = vmatprep.subr.mxu0 0.0
    %224 = vmatpush1.msra.mxu0 %v81
    %225 = vmatprep.subr.mxu0 0.0
    %226 = vmatpush1.msra.mxu0 %v82
    %227 = vmatprep.subr.mxu0 0.0
    %228 = vmatpush1.msra.mxu0 %v83
    %229 = vmatprep.subr.mxu0 0.0
    %230 = vmatpush1.msra.mxu0 %v84
    %231 = vmatprep.subr.mxu0 0.0
    %232 = vmatpush1.msra.mxu0 %v85
    %233 = vmatprep.subr.mxu0 0.0
    %234 = vmatpush1.msra.mxu0 %v86
    %235 = vmatprep.subr.mxu0 0.0
    %236 = vmatpush1.msra.mxu0 %v87
    %237 = vmatprep.subr.mxu0 0.0
    %238 = vmatpush1.msra.mxu0 %v88
    %239 = vmatprep.subr.mxu0 0.0
    %240 = vmatpush1.msra.mxu0 %v89
    %241 = vmatprep.subr.mxu0 0.0
    %242 = vmatpush1.msra.mxu0 %v90
    %243 = vmatprep.subr.mxu0 0.0
    %244 = vmatpush1.msra.mxu0 %v91
    %245 = vmatprep.subr.mxu0 0.0
    %246 = vmatpush1.msra.mxu0 %v92
    %247 = vmatprep.subr.mxu0 0.0
    %248 = vmatpush1.msra.mxu0 %v93
    %249 = vmatprep.subr.mxu0 0.0
    %250 = vmatpush1.msra.mxu0 %v94
    %251 = vmatprep.mubr.f32.mxu0 %v18
    %252 = vmatmul.mubr.f32.gmra.mrb[0].mxu0 %v17
    %v253 = vpop.f32.mrb[0].mxu0
    %v254 = vadd.f32 %v169, %v253
    %v255 = vpop.f32.mrb[0].mxu0
    %256 = vmatprep.mubr.f32.mxu0 %v22
    %257 = vmatmul.mubr.f32.gmra.mrb[0].mxu0 %v21
    %v258 = vpop.f32.mrb[0].mxu0
    %v259 = vadd.f32 %v174, %v258
    %v260 = vpop.f32.mrb[0].mxu0
    %261 = vmatprep.mubr.f32.mxu0 %v26
    %262 = vmatmul.mubr.f32.gmra.mrb[0].mxu0 %v25
    %v263 = vpop.f32.mrb[0].mxu0
    %v264 = vadd.f32 %v179, %v263
    %v265 = vpop.f32.mrb[0].mxu0
    %266 = vmatprep.mubr.f32.mxu0 %v30
    %267 = vmatmul.mubr.f32.gmra.mrb[0].mxu0 %v29
    %v268 = vpop.f32.mrb[0].mxu0
    %v269 = vadd.f32 %v184, %v268
    %v270 = vpop.f32.mrb[0].mxu0
    %271 = vdwg.mxu0
    %vm272 = vcmask 261120
    %273 = vst.msk [vmem:[#allocation2] sm:$0xff] %vm272, %v254
    %274 = vst.msk [vmem:[#allocation2 + $0x8] sm:$0xff] %vm272, %v259
    %275 = vst.msk [vmem:[#allocation2 + $0x10] sm:$0xff] %vm272, %v264
    %276 = vst.msk [vmem:[#allocation2 + $0x18] sm:$0xff] %vm272, %v269
    // Predicated region
    $region14: #{_lambda_.3} parent=1 // pred_check
      _
    $region15: #{_lambda_.3} parent=1 // pred_check_branch
      %278 = sbr.rel (0) target = $region17
    $region16: #{_lambda_.3} parent=1 // pred_region
      %s280 = ssub.s32 512, 512
      %281 = vsyncadd [#allocation3], %s280
      %s282 = sshll.u32 [#allocation2], 4
      %s283 = int_to_ptr.vmem [resolvable:$true] %s282
      %288 = dma.vmem_to_hbm [thread:$0]  %s283, 512, %s3, [#allocation3], 128, 128, 8
    $region17: #{_lambda_.3} parent=1 // pred_fallthru
      _
    // Predicated region
    $region18: #{_lambda_.3} parent=1 // pred_check
      _
    $region19: #{_lambda_.3} parent=1 // pred_check_branch
      %290 = sbr.rel (0) target = $region21
    $region20: #{_lambda_.3} parent=1 // pred_region
      %291 = dma.done [#allocation3], 512
    $region21: #{_lambda_.3} parent=1 // pred_fallthru
      _
    %292 = vsyncpa [#allocation3], 1

// kernel: _lambda_.2
$region0: #{_lambda_.2}
  #allocation0 [shape = 'u32[]', space=smem, size = 0x4, offset = 0x4, fixed_abs, tag = 'smem constant byte address 0x4 - core index']
  #allocation1 [shape = 'u32[144,128]{1,0:T(1,128)}', space=vmem, size = 0x12000, scoped, tag = 'internal scratch']
  %s0 = inlined_call_operand.vmem [shape: f32[2,1,288,12], index: 0, kind: input, shape index: {}]
  %s1 = inlined_call_operand.vmem [shape: f32[3,12,32], index: 1, kind: input, shape index: {}]
  %s2 = inlined_call_operand.vmem [shape: f32[1,32], index: 2, kind: input, shape index: {}]
  %s3 = inlined_call_operand.vmem [shape: f32[1,32], index: 3, kind: input, shape index: {}]
  %s4 = inlined_call_operand.vmem [shape: f32[2,256,32], index: 4, kind: output, shape index: {}]
  %s5 = sld [smem:[#allocation0]]
  $region49: #{_lambda_.2} parent=0
    _
  %s7 = ssub.s32 1, %s5
  %s8 = scalar_select 0, %s7, %s5
  loop: start=0, step=1, limit=4
  $region2: #{_lambda_.2} parent=0 // loop_pre_header
    _
  $region3: #{_lambda_.2} parent=0 // loop_header
    %s10 = sphi 0, %s14
    %p11 = scmp.ge.s32.totalorder %s10, 4
    %s17 = sphi 0, %s29
    %s18 = sphi 0, %s25
    %s19 = sphi 0, %s17
    %s20 = sphi 0, %s18
    %s21 = sphi 0, %s19
    %s22 = sphi 0, %s20
    %s34 = sphi 0, %s36
    %s37 = sphi 0, %s34
    %s38 = sphi 0, %s37
    %s54 = sphi 0, %s38
    %s58 = sphi 0, %s58
    %s60 = sphi 0, %s58
    %s61 = sphi 0, %s60
    %s75 = sphi 0, %s61
    %s79 = sphi 0, %s79
    %s81 = sphi 0, %s79
    %s82 = sphi 0, %s81
    %s96 = sphi 0, %s82
    %s100 = sphi 0, %s100
    %s102 = sphi 0, %s100
    %s103 = sphi 0, %s102
    %s117 = sphi 0, %s103
    %s125 = sphi 0, %s127
    %s128 = sphi 0, %s125
    %s129 = sphi 0, %s128
    %s145 = sphi 0, %s129
  $region4: #{_lambda_.2} parent=0 // loop_header_branch
    %13 = sbr.rel (%p11) target = $region8
  $region5: #{_lambda_.2} parent=0 // loop_body
    %s15 = ssub.s32 %s10, 1
    %s16 = ssub.s32 %s10, 2
    %s23 = sadd.s32 1, %s18
    %p24 = scmp.ge.s32.totalorder %s23, 1
    %s25 = scalar_select %p24, 0, %s23
    %s26 = sadd.s32 1, %s17
    %s27 = scalar_select %p24, %s26, %s17
    %p28 = scmp.ge.s32.totalorder %s27, 2
    %s29 = scalar_select %p28, 0, %s27
    %s30 = ssub.s32 %s17, %s29
    %s31 = ssub.s32 %s18, %s25
    %s32 = sor.u32 %s30, %s31
    %p33 = scmp.eq.s32.totalorder %s32, 0
    %s35 = sadd.s32 %s34, 1
    %s36 = scalar_select %p33, %s34, %s35
    %p39 = pneg %p33
    %p40 = scmp.eq.s32.totalorder %s10, 1
    %p41 = por %p39, %p40
    %p42 = scmp.ne.s32.totalorder %s34, %s37
    %p43 = scmp.eq.s32.totalorder %s10, 0
    %p44 = por %p42, %p43
    %p45 = scmp.ne.s32.totalorder %s34, %s37
    %p46 = scmp.eq.s32.totalorder %s15, 1
    %p47 = por %p45, %p46
    %p48 = scmp.ne.s32.totalorder %s37, %s38
    %p49 = scmp.eq.s32.totalorder %s15, 0
    %p50 = por %p48, %p49
    %p51 = scmp.ne.s32.totalorder %s37, %s38
    %p52 = scmp.eq.s32.totalorder %s16, 1
    %p53 = por %p51, %p52
    %p55 = scmp.ne.s32.totalorder %s38, %s54
    %p56 = scmp.eq.s32.totalorder %s16, 0
    %p57 = por %p55, %p56
    %s59 = sadd.s32 %s58, 1
    %p62 = scmp.eq.s32.totalorder %s10, 1
    %p63 = scmp.ne.s32.totalorder %s58, %s60
    %p64 = scmp.eq.s32.totalorder %s10, 0
    %p65 = por %p63, %p64
    %p66 = scmp.ne.s32.totalorder %s58, %s60
    %p67 = scmp.eq.s32.totalorder %s15, 1
    %p68 = por %p66, %p67
    %p69 = scmp.ne.s32.totalorder %s60, %s61
    %p70 = scmp.eq.s32.totalorder %s15, 0
    %p71 = por %p69, %p70
    %p72 = scmp.ne.s32.totalorder %s60, %s61
    %p73 = scmp.eq.s32.totalorder %s16, 1
    %p74 = por %p72, %p73
    %p76 = scmp.ne.s32.totalorder %s61, %s75
    %p77 = scmp.eq.s32.totalorder %s16, 0
    %p78 = por %p76, %p77
    %s80 = sadd.s32 %s79, 1
    %p83 = scmp.eq.s32.totalorder %s10, 1
    %p84 = scmp.ne.s32.totalorder %s79, %s81
    %p85 = scmp.eq.s32.totalorder %s10, 0
    %p86 = por %p84, %p85
    %p87 = scmp.ne.s32.totalorder %s79, %s81
    %p88 = scmp.eq.s32.totalorder %s15, 1
    %p89 = por %p87, %p88
    %p90 = scmp.ne.s32.totalorder %s81, %s82
    %p91 = scmp.eq.s32.totalorder %s15, 0
    %p92 = por %p90, %p91
    %p93 = scmp.ne.s32.totalorder %s81, %s82
    %p94 = scmp.eq.s32.totalorder %s16, 1
    %p95 = por %p93, %p94
    %p97 = scmp.ne.s32.totalorder %s82, %s96
    %p98 = scmp.eq.s32.totalorder %s16, 0
    %p99 = por %p97, %p98
    %s101 = sadd.s32 %s100, 1
    %p104 = scmp.eq.s32.totalorder %s10, 1
    %p105 = scmp.ne.s32.totalorder %s100, %s102
    %p106 = scmp.eq.s32.totalorder %s10, 0
    %p107 = por %p105, %p106
    %p108 = scmp.ne.s32.totalorder %s100, %s102
    %p109 = scmp.eq.s32.totalorder %s15, 1
    %p110 = por %p108, %p109
    %p111 = scmp.ne.s32.totalorder %s102, %s103
    %p112 = scmp.eq.s32.totalorder %s15, 0
    %p113 = por %p111, %p112
    %p114 = scmp.ne.s32.totalorder %s102, %s103
    %p115 = scmp.eq.s32.totalorder %s16, 1
    %p116 = por %p114, %p115
    %p118 = scmp.ne.s32.totalorder %s103, %s117
    %p119 = scmp.eq.s32.totalorder %s16, 0
    %p120 = por %p118, %p119
    %s121 = ssub.s32 %s17, %s29
    %s122 = ssub.s32 %s18, %s25
    %s123 = sor.u32 %s121, %s122
    %p124 = scmp.eq.s32.totalorder %s123, 0
    %s126 = sadd.s32 %s125, 1
    %s127 = scalar_select %p124, %s125, %s126
    %p130 = pneg %p124
    %p131 = scmp.eq.s32.totalorder %s10, 1
    %p132 = por %p130, %p131
    %p133 = scmp.ne.s32.totalorder %s125, %s128
    %p134 = scmp.eq.s32.totalorder %s10, 0
    %p135 = por %p133, %p134
    %p136 = scmp.ne.s32.totalorder %s125, %s128
    %p137 = scmp.eq.s32.totalorder %s15, 1
    %p138 = por %p136, %p137
    %p139 = scmp.ne.s32.totalorder %s128, %s129
    %p140 = scmp.eq.s32.totalorder %s15, 0
    %p141 = por %p139, %p140
    %p142 = scmp.ne.s32.totalorder %s128, %s129
    %p143 = scmp.eq.s32.totalorder %s16, 1
    %p144 = por %p142, %p143
    %p146 = scmp.ne.s32.totalorder %s129, %s145
    %p147 = scmp.eq.s32.totalorder %s16, 0
    %p148 = por %p146, %p147
    %p149 = scmp.le.s32.totalorder 1, %s10
    %p150 = scmp.lt.s32.totalorder %s10, 3
    %p151 = pnand %p149, %p150
    %p152 = pneg %p151
    // Predicated region
    $region9: #{_lambda_.2} parent=5 // pred_check
      _
    $region10: #{_lambda_.2} parent=5 // pred_check_branch
      %154 = sbr.rel (%p151) target = $region12
    $region11: #{_lambda_.2} parent=5 // pred_region
      %s155 = ssub.s32 %s10, 1
      // Predicated region
      $region13: #{_lambda_.2} parent=11 // pred_check
        %p156 = pneg %p71
      $region14: #{_lambda_.2} parent=11 // pred_check_branch
        %158 = sbr.rel (%p156) target = $region16
      $region15: #{_lambda_.2} parent=11 // pred_region
        _
      $region16: #{_lambda_.2} parent=11 // pred_fallthru
        _
      // Predicated region
      $region17: #{_lambda_.2} parent=11 // pred_check
        %p159 = pneg %p92
      $region18: #{_lambda_.2} parent=11 // pred_check_branch
        %161 = sbr.rel (%p159) target = $region20
      $region19: #{_lambda_.2} parent=11 // pred_region
        _
      $region20: #{_lambda_.2} parent=11 // pred_fallthru
        _
      // Predicated region
      $region21: #{_lambda_.2} parent=11 // pred_check
        %p162 = pneg %p113
      $region22: #{_lambda_.2} parent=11 // pred_check_branch
        %164 = sbr.rel (%p162) target = $region24
      $region23: #{_lambda_.2} parent=11 // pred_region
        _
      $region24: #{_lambda_.2} parent=11 // pred_fallthru
        _
    $region12: #{_lambda_.2} parent=5 // pred_fallthru
      _
    %p165 = scmp.lt.s32.totalorder %s10, 2
    // Predicated region
    $region25: #{_lambda_.2} parent=5 // pred_check
      %p166 = pneg %p165
    $region26: #{_lambda_.2} parent=5 // pred_check_branch
      %168 = sbr.rel (%p166) target = $region28
    $region27: #{_lambda_.2} parent=5 // pred_region
      // Predicated region
      $region29: #{_lambda_.2} parent=27 // pred_check
        %p169 = pneg %p44
      $region30: #{_lambda_.2} parent=27 // pred_check_branch
        %171 = sbr.rel (%p169) target = $region32
      $region31: #{_lambda_.2} parent=27 // pred_region
        %p172 = scmp.lt.s32.totalorder %s17, 1
        %s173 = scalar_select %p172, %s17, 1
        %p174 = scmp.lt.s32.totalorder %s18, 0
        %s175 = scalar_select %p174, %s18, 0
        %s176 = smul.addr %s175, 36
        %s177 = smul.addr %s173, 36
        %s178 = sadd.s32 %s176, %s177
        %s179 = smul.addr %s178, 8
        %s180 = scalar_lea.vmem %s0, %s179
      $region32: #{_lambda_.2} parent=27 // pred_fallthru
        _
    $region28: #{_lambda_.2} parent=5 // pred_fallthru
      _
    %p181 = scmp.le.s32.totalorder 1, %s10
    %p182 = scmp.lt.s32.totalorder %s10, 3
    %p183 = pnand %p181, %p182
    %p184 = pneg %p183
    // Predicated region
    $region33: #{_lambda_.2} parent=5 // pred_check
      _
    $region34: #{_lambda_.2} parent=5 // pred_check_branch
      %186 = sbr.rel (%p183) target = $region36
    $region35: #{_lambda_.2} parent=5 // pred_region
      %s187 = ssub.s32 %s10, 1
      %p188 = scmp.lt.s32.totalorder %s19, 1
      %s189 = scalar_select %p188, %s19, 1
      %p190 = scmp.lt.s32.totalorder %s20, 0
      %s191 = scalar_select %p190, %s20, 0
      %s192 = smul.addr %s191, 36
      %s193 = smul.addr %s189, 36
      %s194 = sadd.s32 %s192, %s193
      %s195 = smul.addr %s194, 8
      %s196 = scalar_lea.vmem %s0, %s195
      %p197 = pneg %p50
      %p198 = pneg %p47
      %p199 = pneg %p71
      %p200 = pneg %p68
      %p201 = pneg %p92
      %p202 = pneg %p89
      %p203 = pneg %p113
      %p204 = pneg %p110
      %p205 = pneg %p141
      %p206 = pneg %p138
      %s207 = smul.u32 32, %s20
      %p208 = scmp.lt.s32.totalorder %s19, 1
      %s209 = scalar_select %p208, %s19, 1
      %p210 = scmp.lt.s32.totalorder %s207, 31
      %s211 = scalar_select %p210, %s207, 31
      %s212 = smul.addr %s209, 32
      %s213 = sadd.s32 %s211, %s212
      %s214 = smul.addr %s213, 8
      %s215 = scalar_lea.vmem %s4, %s214
      %p216 = scmp.lt.s32.totalorder %s19, 1
      %s217 = scalar_select %p216, %s19, 1
      %p218 = scmp.lt.s32.totalorder %s20, 0
      %s219 = scalar_select %p218, %s20, 0
      %s220 = smul.addr %s219, 36
      %s221 = smul.addr %s217, 36
      %s222 = sadd.s32 %s220, %s221
      %s223 = smul.addr %s222, 8
      %s224 = scalar_lea.vmem %s0, %s223
      %s225 = smul.u32 32, %s20
      %p226 = scmp.lt.s32.totalorder %s19, 1
      %s227 = scalar_select %p226, %s19, 1
      %p228 = scmp.lt.s32.totalorder %s225, 31
      %s229 = scalar_select %p228, %s225, 31
      %s230 = smul.addr %s227, 32
      %s231 = sadd.s32 %s229, %s230
      %s232 = smul.addr %s231, 8
      %s233 = scalar_lea.vmem %s4, %s232
      %s234 = smul.u32 32, %s20
      %v235 = vld [vmem:[%s224] sm:$0xff]
      %v236 = vld [vmem:[%s224 + $0x8] sm:$0xff]
      %v237 = vld [vmem:[%s224 + $0x10] sm:$0xff]
      %v238 = vld [vmem:[%s224 + $0x18] sm:$0xff]
      %v239 = vld [vmem:[%s224 + $0x20] sm:$0xff]
      %v240 = vld [vmem:[%s224 + $0x28] sm:$0xff]
      %v241 = vld [vmem:[%s224 + $0x30] sm:$0xff]
      %v242 = vld [vmem:[%s224 + $0x38] sm:$0xff]
      %v243 = vld [vmem:[%s224 + $0x40] sm:$0xff]
      %v244 = vld [vmem:[%s224 + $0x48] sm:$0xff]
      %v245 = vld [vmem:[%s224 + $0x50] sm:$0xff]
      %v246 = vld [vmem:[%s224 + $0x58] sm:$0xff]
      %v247 = vld [vmem:[%s224 + $0x60] sm:$0xff]
      %v248 = vld [vmem:[%s224 + $0x68] sm:$0xff]
      %v249 = vld [vmem:[%s224 + $0x70] sm:$0xff]
      %v250 = vld [vmem:[%s224 + $0x78] sm:$0xff]
      %v251 = vld [vmem:[%s224 + $0x80] sm:$0xff]
      %v252 = vld [vmem:[%s224 + $0x88] sm:$0xff]
      %v253 = vld [vmem:[%s224 + $0x90] sm:$0xff]
      %v254 = vld [vmem:[%s224 + $0x98] sm:$0xff]
      %v255 = vld [vmem:[%s224 + $0xa0] sm:$0xff]
      %v256 = vld [vmem:[%s224 + $0xa8] sm:$0xff]
      %v257 = vld [vmem:[%s224 + $0xb0] sm:$0xff]
      %v258 = vld [vmem:[%s224 + $0xb8] sm:$0xff]
      %v259 = vld [vmem:[%s224 + $0xc0] sm:$0xff]
      %v260 = vld [vmem:[%s224 + $0xc8] sm:$0xff]
      %v261 = vld [vmem:[%s224 + $0xd0] sm:$0xff]
      %v262 = vld [vmem:[%s224 + $0xd8] sm:$0xff]
      %v263 = vld [vmem:[%s224 + $0xe0] sm:$0xff]
      %v264 = vld [vmem:[%s224 + $0xe8] sm:$0xff]
      %v265 = vld [vmem:[%s224 + $0xf0] sm:$0xff]
      %v266 = vld [vmem:[%s224 + $0xf8] sm:$0xff]
      %v267 = vld [vmem:[%s1] sm:$0xff]
      %v268 = vld [vmem:[%s1 + $0x8] sm:$0xf]
      %v269 = vld [vmem:[%s224 + $0x100] sm:$0xff]
      %v270 = vld [vmem:[%s224 + $0x108] sm:$0xff]
      %s271 = scalar_lea.vmem %s1, 16
      %v272 = vld [vmem:[%s271] sm:$0xff]
      %v273 = vld [vmem:[%s271 + $0x8] sm:$0xf]
      %vm274 = vcmask 97280
      %v276 = vsel %vm274, %v237, 0
      %v279 = vsel %vm274, %v238, 0
      %v282 = vsel %vm274, %v239, 0
      %v285 = vsel %vm274, %v240, 0
      %v288 = vsel %vm274, %v241, 0
      %v291 = vsel %vm274, %v242, 0
      %v294 = vsel %vm274, %v243, 0
      %v297 = vsel %vm274, %v244, 0
      %v300 = vsel %vm274, %v245, 0
      %v303 = vsel %vm274, %v246, 0
      %v306 = vsel %vm274, %v247, 0
      %v309 = vsel %vm274, %v248, 0
      %v312 = vsel %vm274, %v249, 0
      %v315 = vsel %vm274, %v250, 0
      %v318 = vsel %vm274, %v251, 0
      %v321 = vsel %vm274, %v252, 0
      %v324 = vsel %vm274, %v253, 0
      %v327 = vsel %vm274, %v254, 0
      %v330 = vsel %vm274, %v255, 0
      %v333 = vsel %vm274, %v256, 0
      %v336 = vsel %vm274, %v257, 0
      %v339 = vsel %vm274, %v258, 0
      %v342 = vsel %vm274, %v259, 0
      %v345 = vsel %vm274, %v260, 0
      %v348 = vsel %vm274, %v261, 0
      %v351 = vsel %vm274, %v262, 0
      %v354 = vsel %vm274, %v263, 0
      %v357 = vsel %vm274, %v264, 0
      %v360 = vsel %vm274, %v265, 0
      %v363 = vsel %vm274, %v266, 0
      %v366 = vsel %vm274, %v269, 0
      %v369 = vsel %vm274, %v270, 0
      %vm371 = vcmask 1043456
      %v373 = vsel %vm371, %v273, 0
      %375 = vmatprep.subr.mxu0 0.0
      %376 = vmatpush1.msra.mxu0 %v272
      %377 = vmatprep.subr.mxu0 0.0
      %378 = vmatpush1.msra.mxu0 %v373
      %379 = vmatprep.subr.mxu0 0.0
      %380 = vmatpush1.msra.mxu0 0.0
      %381 = vmatprep.subr.mxu0 0.0
      %382 = vmatpush1.msra.mxu0 0.0
      %383 = vmatprep.subr.mxu0 0.0
      %384 = vmatpush1.msra.mxu0 0.0
      %385 = vmatprep.subr.mxu0 0.0
      %386 = vmatpush1.msra.mxu0 0.0
      %387 = vmatprep.subr.mxu0 0.0
      %388 = vmatpush1.msra.mxu0 0.0
      %389 = vmatprep.subr.mxu0 0.0
      %390 = vmatpush1.msra.mxu0 0.0
      %391 = vmatprep.subr.mxu0 0.0
      %392 = vmatpush1.msra.mxu0 0.0
      %393 = vmatprep.subr.mxu0 0.0
      %394 = vmatpush1.msra.mxu0 0.0
      %395 = vmatprep.subr.mxu0 0.0
      %396 = vmatpush1.msra.mxu0 0.0
      %397 = vmatprep.subr.mxu0 0.0
      %398 = vmatpush1.msra.mxu0 0.0
      %399 = vmatprep.subr.mxu0 0.0
      %400 = vmatpush1.msra.mxu0 0.0
      %401 = vmatprep.subr.mxu0 0.0
      %402 = vmatpush1.msra.mxu0 0.0
      %403 = vmatprep.subr.mxu0 0.0
      %404 = vmatpush1.msra.mxu0 0.0
      %405 = vmatprep.subr.mxu0 0.0
      %406 = vmatpush1.msra.mxu0 0.0
      %407 = vmatprep.subr.mxu0 0.0
      %408 = vmatpush1.msra.mxu0 0.0
      %409 = vmatprep.subr.mxu0 0.0
      %410 = vmatpush1.msra.mxu0 0.0
      %411 = vmatprep.subr.mxu0 0.0
      %412 = vmatpush1.msra.mxu0 0.0
      %413 = vmatprep.subr.mxu0 0.0
      %414 = vmatpush1.msra.mxu0 0.0
      %415 = vmatprep.subr.mxu0 0.0
      %416 = vmatpush1.msra.mxu0 0.0
      %417 = vmatprep.subr.mxu0 0.0
      %418 = vmatpush1.msra.mxu0 0.0
      %419 = vmatprep.subr.mxu0 0.0
      %420 = vmatpush1.msra.mxu0 0.0
      %421 = vmatprep.subr.mxu0 0.0
      %422 = vmatpush1.msra.mxu0 0.0
      %423 = vmatprep.subr.mxu0 0.0
      %424 = vmatpush1.msra.mxu0 0.0
      %425 = vmatprep.subr.mxu0 0.0
      %426 = vmatpush1.msra.mxu0 0.0
      %427 = vmatprep.subr.mxu0 0.0
      %428 = vmatpush1.msra.mxu0 0.0
      %429 = vmatprep.subr.mxu0 0.0
      %430 = vmatpush1.msra.mxu0 0.0
      %431 = vmatprep.subr.mxu0 0.0
      %432 = vmatpush1.msra.mxu0 0.0
      %433 = vmatprep.subr.mxu0 0.0
      %434 = vmatpush1.msra.mxu0 0.0
      %435 = vmatprep.subr.mxu0 0.0
      %436 = vmatpush1.msra.mxu0 0.0
      %437 = vmatprep.subr.mxu0 0.0
      %438 = vmatpush1.msra.mxu0 0.0
      %439 = vmatprep.mubr.f32.mxu0 0.0
      %440 = vmatmul.mubr.f32.gmra.mrb[0].mxu0 %v276
      %v441 = vpop.f32.mrb[0].mxu0
      %v442 = vadd.f32 0.0, %v441
      %v443 = vpop.f32.mrb[0].mxu0
      %444 = vmatprep.mubr.f32.mxu0 0.0
      %445 = vmatmul.mubr.f32.gmra.mrb[0].mxu0 %v279
      %v446 = vpop.f32.mrb[0].mxu0
      %v447 = vadd.f32 0.0, %v446
      %v448 = vpop.f32.mrb[0].mxu0
      %449 = vmatprep.mubr.f32.mxu0 0.0
      %450 = vmatmul.mubr.f32.gmra.mrb[0].mxu0 %v282
      %v451 = vpop.f32.mrb[0].mxu0
      %v452 = vadd.f32 0.0, %v451
      %v453 = vpop.f32.mrb[0].mxu0
      %454 = vmatprep.mubr.f32.mxu0 0.0
      %455 = vmatmul.mubr.f32.gmra.mrb[0].mxu0 %v285
      %v456 = vpop.f32.mrb[0].mxu0
      %v457 = vadd.f32 0.0, %v456
      %v458 = vpop.f32.mrb[0].mxu0
      %459 = vmatprep.mubr.f32.mxu0 0.0
      %460 = vmatmul.mubr.f32.gmra.mrb[0].mxu0 %v288
      %v461 = vpop.f32.mrb[0].mxu0
      %v462 = vadd.f32 0.0, %v461
      %v463 = vpop.f32.mrb[0].mxu0
      %464 = vmatprep.mubr.f32.mxu0 0.0
      %465 = vmatmul.mubr.f32.gmra.mrb[0].mxu0 %v291
      %v466 = vpop.f32.mrb[0].mxu0
      %v467 = vadd.f32 0.0, %v466
      %v468 = vpop.f32.mrb[0].mxu0
      %469 = vmatprep.mubr.f32.mxu0 0.0
      %470 = vmatmul.mubr.f32.gmra.mrb[0].mxu0 %v294
      %v471 = vpop.f32.mrb[0].mxu0
      %v472 = vadd.f32 0.0, %v471
      %v473 = vpop.f32.mrb[0].mxu0
      %474 = vmatprep.mubr.f32.mxu0 0.0
      %475 = vmatmul.mubr.f32.gmra.mrb[0].mxu0 %v297
      %v476 = vpop.f32.mrb[0].mxu0
      %v477 = vadd.f32 0.0, %v476
      %v478 = vpop.f32.mrb[0].mxu0
      %479 = vmatprep.mubr.f32.mxu0 0.0
      %480 = vmatmul.mubr.f32.gmra.mrb[0].mxu0 %v300
      %v481 = vpop.f32.mrb[0].mxu0
      %v482 = vadd.f32 0.0, %v481
      %v483 = vpop.f32.mrb[0].mxu0
      %484 = vmatprep.mubr.f32.mxu0 0.0
      %485 = vmatmul.mubr.f32.gmra.mrb[0].mxu0 %v303
      %v486 = vpop.f32.mrb[0].mxu0
      %v487 = vadd.f32 0.0, %v486
      %v488 = vpop.f32.mrb[0].mxu0
      %489 = vmatprep.mubr.f32.mxu0 0.0
      %490 = vmatmul.mubr.f32.gmra.mrb[0].mxu0 %v306
      %v491 = vpop.f32.mrb[0].mxu0
      %v492 = vadd.f32 0.0, %v491
      %v493 = vpop.f32.mrb[0].mxu0
      %494 = vmatprep.mubr.f32.mxu0 0.0
      %495 = vmatmul.mubr.f32.gmra.mrb[0].mxu0 %v309
      %v496 = vpop.f32.mrb[0].mxu0
      %v497 = vadd.f32 0.0, %v496
      %v498 = vpop.f32.mrb[0].mxu0
      %499 = vmatprep.mubr.f32.mxu0 0.0
      %500 = vmatmul.mubr.f32.gmra.mrb[0].mxu0 %v312
      %v501 = vpop.f32.mrb[0].mxu0
      %v502 = vadd.f32 0.0, %v501
      %v503 = vpop.f32.mrb[0].mxu0
      %504 = vmatprep.mubr.f32.mxu0 0.0
      %505 = vmatmul.mubr.f32.gmra.mrb[0].mxu0 %v315
      %v506 = vpop.f32.mrb[0].mxu0
      %v507 = vadd.f32 0.0, %v506
      %v508 = vpop.f32.mrb[0].mxu0
      %509 = vmatprep.mubr.f32.mxu0 0.0
      %510 = vmatmul.mubr.f32.gmra.mrb[0].mxu0 %v318
      %v511 = vpop.f32.mrb[0].mxu0
      %v512 = vadd.f32 0.0, %v511
      %v513 = vpop.f32.mrb[0].mxu0
      %514 = vmatprep.mubr.f32.mxu0 0.0
      %515 = vmatmul.mubr.f32.gmra.mrb[0].mxu0 %v321
      %v516 = vpop.f32.mrb[0].mxu0
      %v517 = vadd.f32 0.0, %v516
      %v518 = vpop.f32.mrb[0].mxu0
      %519 = vmatprep.mubr.f32.mxu0 0.0
      %520 = vmatmul.mubr.f32.gmra.mrb[0].mxu0 %v324
      %v521 = vpop.f32.mrb[0].mxu0
      %v522 = vadd.f32 0.0, %v521
      %v523 = vpop.f32.mrb[0].mxu0
      %524 = vmatprep.mubr.f32.mxu0 0.0
      %525 = vmatmul.mubr.f32.gmra.mrb[0].mxu0 %v327
      %v526 = vpop.f32.mrb[0].mxu0
      %v527 = vadd.f32 0.0, %v526
      %v528 = vpop.f32.mrb[0].mxu0
      %529 = vmatprep.mubr.f32.mxu0 0.0
      %530 = vmatmul.mubr.f32.gmra.mrb[0].mxu0 %v330
      %v531 = vpop.f32.mrb[0].mxu0
      %v532 = vadd.f32 0.0, %v531
      %v533 = vpop.f32.mrb[0].mxu0
      %534 = vmatprep.mubr.f32.mxu0 0.0
      %535 = vmatmul.mubr.f32.gmra.mrb[0].mxu0 %v333
      %v536 = vpop.f32.mrb[0].mxu0
      %v537 = vadd.f32 0.0, %v536
      %v538 = vpop.f32.mrb[0].mxu0
      %539 = vmatprep.mubr.f32.mxu0 0.0
      %540 = vmatmul.mubr.f32.gmra.mrb[0].mxu0 %v336
      %v541 = vpop.f32.mrb[0].mxu0
      %v542 = vadd.f32 0.0, %v541
      %v543 = vpop.f32.mrb[0].mxu0
      %544 = vmatprep.mubr.f32.mxu0 0.0
      %545 = vmatmul.mubr.f32.gmra.mrb[0].mxu0 %v339
      %v546 = vpop.f32.mrb[0].mxu0
      %v547 = vadd.f32 0.0, %v546
      %v548 = vpop.f32.mrb[0].mxu0
      %549 = vmatprep.mubr.f32.mxu0 0.0
      %550 = vmatmul.mubr.f32.gmra.mrb[0].mxu0 %v342
      %v551 = vpop.f32.mrb[0].mxu0
      %v552 = vadd.f32 0.0, %v551
      %v553 = vpop.f32.mrb[0].mxu0
      %554 = vmatprep.mubr.f32.mxu0 0.0
      %555 = vmatmul.mubr.f32.gmra.mrb[0].mxu0 %v345
      %v556 = vpop.f32.mrb[0].mxu0
      %v557 = vadd.f32 0.0, %v556
      %v558 = vpop.f32.mrb[0].mxu0
      %559 = vmatprep.mubr.f32.mxu0 0.0
      %560 = vmatmul.mubr.f32.gmra.mrb[0].mxu0 %v348
      %v561 = vpop.f32.mrb[0].mxu0
      %v562 = vadd.f32 0.0, %v561
      %v563 = vpop.f32.mrb[0].mxu0
      %564 = vmatprep.mubr.f32.mxu0 0.0
      %565 = vmatmul.mubr.f32.gmra.mrb[0].mxu0 %v351
      %v566 = vpop.f32.mrb[0].mxu0
      %v567 = vadd.f32 0.0, %v566
      %v568 = vpop.f32.mrb[0].mxu0
      %569 = vmatprep.mubr.f32.mxu0 0.0
      %570 = vmatmul.mubr.f32.gmra.mrb[0].mxu0 %v354
      %v571 = vpop.f32.mrb[0].mxu0
      %v572 = vadd.f32 0.0, %v571
      %v573 = vpop.f32.mrb[0].mxu0
      %574 = vmatprep.mubr.f32.mxu0 0.0
      %575 = vmatmul.mubr.f32.gmra.mrb[0].mxu0 %v357
      %v576 = vpop.f32.mrb[0].mxu0
      %v577 = vadd.f32 0.0, %v576
      %v578 = vpop.f32.mrb[0].mxu0
      %579 = vmatprep.mubr.f32.mxu0 0.0
      %580 = vmatmul.mubr.f32.gmra.mrb[0].mxu0 %v360
      %v581 = vpop.f32.mrb[0].mxu0
      %v582 = vadd.f32 0.0, %v581
      %v583 = vpop.f32.mrb[0].mxu0
      %584 = vmatprep.mubr.f32.mxu0 0.0
      %585 = vmatmul.mubr.f32.gmra.mrb[0].mxu0 %v363
      %v586 = vpop.f32.mrb[0].mxu0
      %v587 = vadd.f32 0.0, %v586
      %v588 = vpop.f32.mrb[0].mxu0
      %589 = vmatprep.mubr.f32.mxu0 0.0
      %590 = vmatmul.mubr.f32.gmra.mrb[0].mxu0 %v366
      %v591 = vpop.f32.mrb[0].mxu0
      %v592 = vadd.f32 0.0, %v591
      %v593 = vpop.f32.mrb[0].mxu0
      %594 = vmatprep.mubr.f32.mxu0 0.0
      %595 = vmatmul.mubr.f32.gmra.mrb[0].mxu0 %v369
      %v596 = vpop.f32.mrb[0].mxu0
      %v597 = vadd.f32 0.0, %v596
      %v598 = vpop.f32.mrb[0].mxu0
      %599 = vdwg.mxu0
      %v601 = vsel %vm274, %v235, 0
      %v604 = vsel %vm274, %v236, 0
      %v607 = vsel %vm371, %v268, 0
      %609 = vmatprep.subr.mxu0 0.0
      %610 = vmatpush1.msra.mxu0 %v267
      %611 = vmatprep.subr.mxu0 0.0
      %612 = vmatpush1.msra.mxu0 %v607
      %613 = vmatprep.subr.mxu0 0.0
      %614 = vmatpush1.msra.mxu0 0.0
      %615 = vmatprep.subr.mxu0 0.0
      %616 = vmatpush1.msra.mxu0 0.0
      %617 = vmatprep.subr.mxu0 0.0
      %618 = vmatpush1.msra.mxu0 0.0
      %619 = vmatprep.subr.mxu0 0.0
      %620 = vmatpush1.msra.mxu0 0.0
      %621 = vmatprep.subr.mxu0 0.0
      %622 = vmatpush1.msra.mxu0 0.0
      %623 = vmatprep.subr.mxu0 0.0
      %624 = vmatpush1.msra.mxu0 0.0
      %625 = vmatprep.subr.mxu0 0.0
      %626 = vmatpush1.msra.mxu0 0.0
      %627 = vmatprep.subr.mxu0 0.0
      %628 = vmatpush1.msra.mxu0 0.0
      %629 = vmatprep.subr.mxu0 0.0
      %630 = vmatpush1.msra.mxu0 0.0
      %631 = vmatprep.subr.mxu0 0.0
      %632 = vmatpush1.msra.mxu0 0.0
      %633 = vmatprep.subr.mxu0 0.0
      %634 = vmatpush1.msra.mxu0 0.0
      %635 = vmatprep.subr.mxu0 0.0
      %636 = vmatpush1.msra.mxu0 0.0
      %637 = vmatprep.subr.mxu0 0.0
      %638 = vmatpush1.msra.mxu0 0.0
      %639 = vmatprep.subr.mxu0 0.0
      %640 = vmatpush1.msra.mxu0 0.0
      %641 = vmatprep.subr.mxu0 0.0
      %642 = vmatpush1.msra.mxu0 0.0
      %643 = vmatprep.subr.mxu0 0.0
      %644 = vmatpush1.msra.mxu0 0.0
      %645 = vmatprep.subr.mxu0 0.0
      %646 = vmatpush1.msra.mxu0 0.0
      %647 = vmatprep.subr.mxu0 0.0
      %648 = vmatpush1.msra.mxu0 0.0
      %649 = vmatprep.subr.mxu0 0.0
      %650 = vmatpush1.msra.mxu0 0.0
      %651 = vmatprep.subr.mxu0 0.0
      %652 = vmatpush1.msra.mxu0 0.0
      %653 = vmatprep.subr.mxu0 0.0
      %654 = vmatpush1.msra.mxu0 0.0
      %655 = vmatprep.subr.mxu0 0.0
      %656 = vmatpush1.msra.mxu0 0.0
      %657 = vmatprep.subr.mxu0 0.0
      %658 = vmatpush1.msra.mxu0 0.0
      %659 = vmatprep.subr.mxu0 0.0
      %660 = vmatpush1.msra.mxu0 0.0
      %661 = vmatprep.subr.mxu0 0.0
      %662 = vmatpush1.msra.mxu0 0.0
      %663 = vmatprep.subr.mxu0 0.0
      %664 = vmatpush1.msra.mxu0 0.0
      %665 = vmatprep.subr.mxu0 0.0
      %666 = vmatpush1.msra.mxu0 0.0
      %667 = vmatprep.subr.mxu0 0.0
      %668 = vmatpush1.msra.mxu0 0.0
      %669 = vmatprep.subr.mxu0 0.0
      %670 = vmatpush1.msra.mxu0 0.0
      %671 = vmatprep.subr.mxu0 0.0
      %672 = vmatpush1.msra.mxu0 0.0
      %673 = vmatprep.mubr.f32.mxu0 0.0
      %674 = vmatmul.mubr.f32.gmra.mrb[0].mxu0 %v601
      %v675 = vpop.f32.mrb[0].mxu0
      %v676 = vadd.f32 %v442, %v675
      %v677 = vpop.f32.mrb[0].mxu0
      %678 = vmatprep.mubr.f32.mxu0 0.0
      %679 = vmatmul.mubr.f32.gmra.mrb[0].mxu0 %v604
      %v680 = vpop.f32.mrb[0].mxu0
      %v681 = vadd.f32 %v447, %v680
      %v682 = vpop.f32.mrb[0].mxu0
      %683 = vmatprep.mubr.f32.mxu0 0.0
      %684 = vmatmul.mubr.f32.gmra.mrb[0].mxu0 %v276
      %v685 = vpop.f32.mrb[0].mxu0
      %v686 = vadd.f32 %v452, %v685
      %v687 = vpop.f32.mrb[0].mxu0
      %688 = vmatprep.mubr.f32.mxu0 0.0
      %689 = vmatmul.mubr.f32.gmra.mrb[0].mxu0 %v279
      %v690 = vpop.f32.mrb[0].mxu0
      %v691 = vadd.f32 %v457, %v690
      %v692 = vpop.f32.mrb[0].mxu0
      %693 = vmatprep.mubr.f32.mxu0 0.0
      %694 = vmatmul.mubr.f32.gmra.mrb[0].mxu0 %v282
      %v695 = vpop.f32.mrb[0].mxu0
      %v696 = vadd.f32 %v462, %v695
      %v697 = vpop.f32.mrb[0].mxu0
      %698 = vmatprep.mubr.f32.mxu0 0.0
      %699 = vmatmul.mubr.f32.gmra.mrb[0].mxu0 %v285
      %v700 = vpop.f32.mrb[0].mxu0
      %v701 = vadd.f32 %v467, %v700
      %v702 = vpop.f32.mrb[0].mxu0
      %703 = vmatprep.mubr.f32.mxu0 0.0
      %704 = vmatmul.mubr.f32.gmra.mrb[0].mxu0 %v288
      %v705 = vpop.f32.mrb[0].mxu0
      %v706 = vadd.f32 %v472, %v705
      %v707 = vpop.f32.mrb[0].mxu0
      %708 = vmatprep.mubr.f32.mxu0 0.0
      %709 = vmatmul.mubr.f32.gmra.mrb[0].mxu0 %v291
      %v710 = vpop.f32.mrb[0].mxu0
      %v711 = vadd.f32 %v477, %v710
      %v712 = vpop.f32.mrb[0].mxu0
      %713 = vmatprep.mubr.f32.mxu0 0.0
      %714 = vmatmul.mubr.f32.gmra.mrb[0].mxu0 %v294
      %v715 = vpop.f32.mrb[0].mxu0
      %v716 = vadd.f32 %v482, %v715
      %v717 = vpop.f32.mrb[0].mxu0
      %718 = vmatprep.mubr.f32.mxu0 0.0
      %719 = vmatmul.mubr.f32.gmra.mrb[0].mxu0 %v297
      %v720 = vpop.f32.mrb[0].mxu0
      %v721 = vadd.f32 %v487, %v720
      %v722 = vpop.f32.mrb[0].mxu0
      %723 = vmatprep.mubr.f32.mxu0 0.0
      %724 = vmatmul.mubr.f32.gmra.mrb[0].mxu0 %v300
      %v725 = vpop.f32.mrb[0].mxu0
      %v726 = vadd.f32 %v492, %v725
      %v727 = vpop.f32.mrb[0].mxu0
      %728 = vmatprep.mubr.f32.mxu0 0.0
      %729 = vmatmul.mubr.f32.gmra.mrb[0].mxu0 %v303
      %v730 = vpop.f32.mrb[0].mxu0
      %v731 = vadd.f32 %v497, %v730
      %v732 = vpop.f32.mrb[0].mxu0
      %733 = vmatprep.mubr.f32.mxu0 0.0
      %734 = vmatmul.mubr.f32.gmra.mrb[0].mxu0 %v306
      %v735 = vpop.f32.mrb[0].mxu0
      %v736 = vadd.f32 %v502, %v735
      %v737 = vpop.f32.mrb[0].mxu0
      %738 = vmatprep.mubr.f32.mxu0 0.0
      %739 = vmatmul.mubr.f32.gmra.mrb[0].mxu0 %v309
      %v740 = vpop.f32.mrb[0].mxu0
      %v741 = vadd.f32 %v507, %v740
      %v742 = vpop.f32.mrb[0].mxu0
      %743 = vmatprep.mubr.f32.mxu0 0.0
      %744 = vmatmul.mubr.f32.gmra.mrb[0].mxu0 %v312
      %v745 = vpop.f32.mrb[0].mxu0
      %v746 = vadd.f32 %v512, %v745
      %v747 = vpop.f32.mrb[0].mxu0
      %748 = vmatprep.mubr.f32.mxu0 0.0
      %749 = vmatmul.mubr.f32.gmra.mrb[0].mxu0 %v315
      %v750 = vpop.f32.mrb[0].mxu0
      %v751 = vadd.f32 %v517, %v750
      %v752 = vpop.f32.mrb[0].mxu0
      %753 = vmatprep.mubr.f32.mxu0 0.0
      %754 = vmatmul.mubr.f32.gmra.mrb[0].mxu0 %v318
      %v755 = vpop.f32.mrb[0].mxu0
      %v756 = vadd.f32 %v522, %v755
      %v757 = vpop.f32.mrb[0].mxu0
      %758 = vmatprep.mubr.f32.mxu0 0.0
      %759 = vmatmul.mubr.f32.gmra.mrb[0].mxu0 %v321
      %v760 = vpop.f32.mrb[0].mxu0
      %v761 = vadd.f32 %v527, %v760
      %v762 = vpop.f32.mrb[0].mxu0
      %763 = vmatprep.mubr.f32.mxu0 0.0
      %764 = vmatmul.mubr.f32.gmra.mrb[0].mxu0 %v324
      %v765 = vpop.f32.mrb[0].mxu0
      %v766 = vadd.f32 %v532, %v765
      %v767 = vpop.f32.mrb[0].mxu0
      %768 = vmatprep.mubr.f32.mxu0 0.0
      %769 = vmatmul.mubr.f32.gmra.mrb[0].mxu0 %v327
      %v770 = vpop.f32.mrb[0].mxu0
      %v771 = vadd.f32 %v537, %v770
      %v772 = vpop.f32.mrb[0].mxu0
      %773 = vmatprep.mubr.f32.mxu0 0.0
      %774 = vmatmul.mubr.f32.gmra.mrb[0].mxu0 %v330
      %v775 = vpop.f32.mrb[0].mxu0
      %v776 = vadd.f32 %v542, %v775
      %v777 = vpop.f32.mrb[0].mxu0
      %778 = vmatprep.mubr.f32.mxu0 0.0
      %779 = vmatmul.mubr.f32.gmra.mrb[0].mxu0 %v333
      %v780 = vpop.f32.mrb[0].mxu0
      %v781 = vadd.f32 %v547, %v780
      %v782 = vpop.f32.mrb[0].mxu0
      %783 = vmatprep.mubr.f32.mxu0 0.0
      %784 = vmatmul.mubr.f32.gmra.mrb[0].mxu0 %v336
      %v785 = vpop.f32.mrb[0].mxu0
      %v786 = vadd.f32 %v552, %v785
      %v787 = vpop.f32.mrb[0].mxu0
      %788 = vmatprep.mubr.f32.mxu0 0.0
      %789 = vmatmul.mubr.f32.gmra.mrb[0].mxu0 %v339
      %v790 = vpop.f32.mrb[0].mxu0
      %v791 = vadd.f32 %v557, %v790
      %v792 = vpop.f32.mrb[0].mxu0
      %793 = vmatprep.mubr.f32.mxu0 0.0
      %794 = vmatmul.mubr.f32.gmra.mrb[0].mxu0 %v342
      %v795 = vpop.f32.mrb[0].mxu0
      %v796 = vadd.f32 %v562, %v795
      %v797 = vpop.f32.mrb[0].mxu0
      %798 = vmatprep.mubr.f32.mxu0 0.0
      %799 = vmatmul.mubr.f32.gmra.mrb[0].mxu0 %v345
      %v800 = vpop.f32.mrb[0].mxu0
      %v801 = vadd.f32 %v567, %v800
      %v802 = vpop.f32.mrb[0].mxu0
      %803 = vmatprep.mubr.f32.mxu0 0.0
      %804 = vmatmul.mubr.f32.gmra.mrb[0].mxu0 %v348
      %v805 = vpop.f32.mrb[0].mxu0
      %v806 = vadd.f32 %v572, %v805
      %v807 = vpop.f32.mrb[0].mxu0
      %808 = vmatprep.mubr.f32.mxu0 0.0
      %809 = vmatmul.mubr.f32.gmra.mrb[0].mxu0 %v351
      %v810 = vpop.f32.mrb[0].mxu0
      %v811 = vadd.f32 %v577, %v810
      %v812 = vpop.f32.mrb[0].mxu0
      %813 = vmatprep.mubr.f32.mxu0 0.0
      %814 = vmatmul.mubr.f32.gmra.mrb[0].mxu0 %v354
      %v815 = vpop.f32.mrb[0].mxu0
      %v816 = vadd.f32 %v582, %v815
      %v817 = vpop.f32.mrb[0].mxu0
      %818 = vmatprep.mubr.f32.mxu0 0.0
      %819 = vmatmul.mubr.f32.gmra.mrb[0].mxu0 %v357
      %v820 = vpop.f32.mrb[0].mxu0
      %v821 = vadd.f32 %v587, %v820
      %v822 = vpop.f32.mrb[0].mxu0
      %823 = vmatprep.mubr.f32.mxu0 0.0
      %824 = vmatmul.mubr.f32.gmra.mrb[0].mxu0 %v360
      %v825 = vpop.f32.mrb[0].mxu0
      %v826 = vadd.f32 %v592, %v825
      %v827 = vpop.f32.mrb[0].mxu0
      %828 = vmatprep.mubr.f32.mxu0 0.0
      %829 = vmatmul.mubr.f32.gmra.mrb[0].mxu0 %v363
      %v830 = vpop.f32.mrb[0].mxu0
      %v831 = vadd.f32 %v597, %v830
      %v832 = vpop.f32.mrb[0].mxu0
      %833 = vdwg.mxu0
      %v834 = vld [vmem:[%s224 + $0x20] sm:$0xff]
      %v835 = vld [vmem:[%s224 + $0x28] sm:$0xff]
      %v836 = vld [vmem:[%s224 + $0x30] sm:$0xff]
      %v837 = vld [vmem:[%s224 + $0x38] sm:$0xff]
      %v838 = vld [vmem:[%s224 + $0x40] sm:$0xff]
      %v839 = vld [vmem:[%s224 + $0x48] sm:$0xff]
      %v840 = vld [vmem:[%s224 + $0x50] sm:$0xff]
      %v841 = vld [vmem:[%s224 + $0x58] sm:$0xff]
      %v842 = vld [vmem:[%s224 + $0x60] sm:$0xff]
      %v843 = vld [vmem:[%s224 + $0x68] sm:$0xff]
      %v844 = vld [vmem:[%s224 + $0x70] sm:$0xff]
      %v845 = vld [vmem:[%s224 + $0x78] sm:$0xff]
      %v846 = vld [vmem:[%s224 + $0x80] sm:$0xff]
      %v847 = vld [vmem:[%s224 + $0x88] sm:$0xff]
      %v848 = vld [vmem:[%s224 + $0x90] sm:$0xff]
      %v849 = vld [vmem:[%s224 + $0x98] sm:$0xff]
      %v850 = vld [vmem:[%s224 + $0xa0] sm:$0xff]
      %v851 = vld [vmem:[%s224 + $0xa8] sm:$0xff]
      %v852 = vld [vmem:[%s224 + $0xb0] sm:$0xff]
      %v853 = vld [vmem:[%s224 + $0xb8] sm:$0xff]
      %v854 = vld [vmem:[%s224 + $0xc0] sm:$0xff]
      %v855 = vld [vmem:[%s224 + $0xc8] sm:$0xff]
      %v856 = vld [vmem:[%s224 + $0xd0] sm:$0xff]
      %v857 = vld [vmem:[%s224 + $0xd8] sm:$0xff]
      %v858 = vld [vmem:[%s224 + $0xe0] sm:$0xff]
      %v859 = vld [vmem:[%s224 + $0xe8] sm:$0xff]
      %v860 = vld [vmem:[%s224 + $0xf0] sm:$0xff]
      %v861 = vld [vmem:[%s224 + $0xf8] sm:$0xff]
      %v862 = vld [vmem:[%s224 + $0x100] sm:$0xff]
      %v863 = vld [vmem:[%s224 + $0x108] sm:$0xff]
      %v864 = vld [vmem:[%s224 + $0x110] sm:$0xff]
      %v865 = vld [vmem:[%s224 + $0x118] sm:$0xff]
      %s866 = scalar_lea.vmem %s1, 32
      %v867 = vld [vmem:[%s866] sm:$0xff]
      %v868 = vld [vmem:[%s866 + $0x8] sm:$0xf]
      %v870 = vsel %vm274, %v834, 0
      %v873 = vsel %vm274, %v835, 0
      %v876 = vsel %vm274, %v836, 0
      %v879 = vsel %vm274, %v837, 0
      %v882 = vsel %vm274, %v838, 0
      %v885 = vsel %vm274, %v839, 0
      %v888 = vsel %vm274, %v840, 0
      %v891 = vsel %vm274, %v841, 0
      %v894 = vsel %vm274, %v842, 0
      %v897 = vsel %vm274, %v843, 0
      %v900 = vsel %vm274, %v844, 0
      %v903 = vsel %vm274, %v845, 0
      %v906 = vsel %vm274, %v846, 0
      %v909 = vsel %vm274, %v847, 0
      %v912 = vsel %vm274, %v848, 0
      %v915 = vsel %vm274, %v849, 0
      %v918 = vsel %vm274, %v850, 0
      %v921 = vsel %vm274, %v851, 0
      %v924 = vsel %vm274, %v852, 0
      %v927 = vsel %vm274, %v853, 0
      %v930 = vsel %vm274, %v854, 0
      %v933 = vsel %vm274, %v855, 0
      %v936 = vsel %vm274, %v856, 0
      %v939 = vsel %vm274, %v857, 0
      %v942 = vsel %vm274, %v858, 0
      %v945 = vsel %vm274, %v859, 0
      %v948 = vsel %vm274, %v860, 0
      %v951 = vsel %vm274, %v861, 0
      %v954 = vsel %vm274, %v862, 0
      %v957 = vsel %vm274, %v863, 0
      %v960 = vsel %vm274, %v864, 0
      %v963 = vsel %vm274, %v865, 0
      %v966 = vsel %vm371, %v868, 0
      %968 = vmatprep.subr.mxu0 0.0
      %969 = vmatpush1.msra.mxu0 %v867
      %970 = vmatprep.subr.mxu0 0.0
      %971 = vmatpush1.msra.mxu0 %v966
      %972 = vmatprep.subr.mxu0 0.0
      %973 = vmatpush1.msra.mxu0 0.0
      %974 = vmatprep.subr.mxu0 0.0
      %975 = vmatpush1.msra.mxu0 0.0
      %976 = vmatprep.subr.mxu0 0.0
      %977 = vmatpush1.msra.mxu0 0.0
      %978 = vmatprep.subr.mxu0 0.0
      %979 = vmatpush1.msra.mxu0 0.0
      %980 = vmatprep.subr.mxu0 0.0
      %981 = vmatpush1.msra.mxu0 0.0
      %982 = vmatprep.subr.mxu0 0.0
      %983 = vmatpush1.msra.mxu0 0.0
      %984 = vmatprep.subr.mxu0 0.0
      %985 = vmatpush1.msra.mxu0 0.0
      %986 = vmatprep.subr.mxu0 0.0
      %987 = vmatpush1.msra.mxu0 0.0
      %988 = vmatprep.subr.mxu0 0.0
      %989 = vmatpush1.msra.mxu0 0.0
      %990 = vmatprep.subr.mxu0 0.0
      %991 = vmatpush1.msra.mxu0 0.0
      %992 = vmatprep.subr.mxu0 0.0
      %993 = vmatpush1.msra.mxu0 0.0
      %994 = vmatprep.subr.mxu0 0.0
      %995 = vmatpush1.msra.mxu0 0.0
      %996 = vmatprep.subr.mxu0 0.0
      %997 = vmatpush1.msra.mxu0 0.0
      %998 = vmatprep.subr.mxu0 0.0
      %999 = vmatpush1.msra.mxu0 0.0
      %1000 = vmatprep.subr.mxu0 0.0
      %1001 = vmatpush1.msra.mxu0 0.0
      %1002 = vmatprep.subr.mxu0 0.0
      %1003 = vmatpush1.msra.mxu0 0.0
      %1004 = vmatprep.subr.mxu0 0.0
      %1005 = vmatpush1.msra.mxu0 0.0
      %1006 = vmatprep.subr.mxu0 0.0
      %1007 = vmatpush1.msra.mxu0 0.0
      %1008 = vmatprep.subr.mxu0 0.0
      %1009 = vmatpush1.msra.mxu0 0.0
      %1010 = vmatprep.subr.mxu0 0.0
      %1011 = vmatpush1.msra.mxu0 0.0
      %1012 = vmatprep.subr.mxu0 0.0
      %1013 = vmatpush1.msra.mxu0 0.0
      %1014 = vmatprep.subr.mxu0 0.0
      %1015 = vmatpush1.msra.mxu0 0.0
      %1016 = vmatprep.subr.mxu0 0.0
      %1017 = vmatpush1.msra.mxu0 0.0
      %1018 = vmatprep.subr.mxu0 0.0
      %1019 = vmatpush1.msra.mxu0 0.0
      %1020 = vmatprep.subr.mxu0 0.0
      %1021 = vmatpush1.msra.mxu0 0.0
      %1022 = vmatprep.subr.mxu0 0.0
      %1023 = vmatpush1.msra.mxu0 0.0
      %1024 = vmatprep.subr.mxu0 0.0
      %1025 = vmatpush1.msra.mxu0 0.0
      %1026 = vmatprep.subr.mxu0 0.0
      %1027 = vmatpush1.msra.mxu0 0.0
      %1028 = vmatprep.subr.mxu0 0.0
      %1029 = vmatpush1.msra.mxu0 0.0
      %1030 = vmatprep.subr.mxu0 0.0
      %1031 = vmatpush1.msra.mxu0 0.0
      %1032 = vmatprep.mubr.f32.mxu0 0.0
      %1033 = vmatmul.mubr.f32.gmra.mrb[0].mxu0 %v870
      %v1034 = vpop.f32.mrb[0].mxu0
      %v1035 = vadd.f32 0.0, %v1034
      %v1036 = vpop.f32.mrb[0].mxu0
      %1037 = vmatprep.mubr.f32.mxu0 0.0
      %1038 = vmatmul.mubr.f32.gmra.mrb[0].mxu0 %v873
      %v1039 = vpop.f32.mrb[0].mxu0
      %v1040 = vadd.f32 0.0, %v1039
      %v1041 = vpop.f32.mrb[0].mxu0
      %1042 = vmatprep.mubr.f32.mxu0 0.0
      %1043 = vmatmul.mubr.f32.gmra.mrb[0].mxu0 %v876
      %v1044 = vpop.f32.mrb[0].mxu0
      %v1045 = vadd.f32 0.0, %v1044
      %v1046 = vpop.f32.mrb[0].mxu0
      %1047 = vmatprep.mubr.f32.mxu0 0.0
      %1048 = vmatmul.mubr.f32.gmra.mrb[0].mxu0 %v879
      %v1049 = vpop.f32.mrb[0].mxu0
      %v1050 = vadd.f32 0.0, %v1049
      %v1051 = vpop.f32.mrb[0].mxu0
      %1052 = vmatprep.mubr.f32.mxu0 0.0
      %1053 = vmatmul.mubr.f32.gmra.mrb[0].mxu0 %v882
      %v1054 = vpop.f32.mrb[0].mxu0
      %v1055 = vadd.f32 0.0, %v1054
      %v1056 = vpop.f32.mrb[0].mxu0
      %1057 = vmatprep.mubr.f32.mxu0 0.0
      %1058 = vmatmul.mubr.f32.gmra.mrb[0].mxu0 %v885
      %v1059 = vpop.f32.mrb[0].mxu0
      %v1060 = vadd.f32 0.0, %v1059
      %v1061 = vpop.f32.mrb[0].mxu0
      %1062 = vmatprep.mubr.f32.mxu0 0.0
      %1063 = vmatmul.mubr.f32.gmra.mrb[0].mxu0 %v888
      %v1064 = vpop.f32.mrb[0].mxu0
      %v1065 = vadd.f32 0.0, %v1064
      %v1066 = vpop.f32.mrb[0].mxu0
      %1067 = vmatprep.mubr.f32.mxu0 0.0
      %1068 = vmatmul.mubr.f32.gmra.mrb[0].mxu0 %v891
      %v1069 = vpop.f32.mrb[0].mxu0
      %v1070 = vadd.f32 0.0, %v1069
      %v1071 = vpop.f32.mrb[0].mxu0
      %1072 = vmatprep.mubr.f32.mxu0 0.0
      %1073 = vmatmul.mubr.f32.gmra.mrb[0].mxu0 %v894
      %v1074 = vpop.f32.mrb[0].mxu0
      %v1075 = vadd.f32 0.0, %v1074
      %v1076 = vpop.f32.mrb[0].mxu0
      %1077 = vmatprep.mubr.f32.mxu0 0.0
      %1078 = vmatmul.mubr.f32.gmra.mrb[0].mxu0 %v897
      %v1079 = vpop.f32.mrb[0].mxu0
      %v1080 = vadd.f32 0.0, %v1079
      %v1081 = vpop.f32.mrb[0].mxu0
      %1082 = vmatprep.mubr.f32.mxu0 0.0
      %1083 = vmatmul.mubr.f32.gmra.mrb[0].mxu0 %v900
      %v1084 = vpop.f32.mrb[0].mxu0
      %v1085 = vadd.f32 0.0, %v1084
      %v1086 = vpop.f32.mrb[0].mxu0
      %1087 = vmatprep.mubr.f32.mxu0 0.0
      %1088 = vmatmul.mubr.f32.gmra.mrb[0].mxu0 %v903
      %v1089 = vpop.f32.mrb[0].mxu0
      %v1090 = vadd.f32 0.0, %v1089
      %v1091 = vpop.f32.mrb[0].mxu0
      %1092 = vmatprep.mubr.f32.mxu0 0.0
      %1093 = vmatmul.mubr.f32.gmra.mrb[0].mxu0 %v906
      %v1094 = vpop.f32.mrb[0].mxu0
      %v1095 = vadd.f32 0.0, %v1094
      %v1096 = vpop.f32.mrb[0].mxu0
      %1097 = vmatprep.mubr.f32.mxu0 0.0
      %1098 = vmatmul.mubr.f32.gmra.mrb[0].mxu0 %v909
      %v1099 = vpop.f32.mrb[0].mxu0
      %v1100 = vadd.f32 0.0, %v1099
      %v1101 = vpop.f32.mrb[0].mxu0
      %1102 = vmatprep.mubr.f32.mxu0 0.0
      %1103 = vmatmul.mubr.f32.gmra.mrb[0].mxu0 %v912
      %v1104 = vpop.f32.mrb[0].mxu0
      %v1105 = vadd.f32 0.0, %v1104
      %v1106 = vpop.f32.mrb[0].mxu0
      %1107 = vmatprep.mubr.f32.mxu0 0.0
      %1108 = vmatmul.mubr.f32.gmra.mrb[0].mxu0 %v915
      %v1109 = vpop.f32.mrb[0].mxu0
      %v1110 = vadd.f32 0.0, %v1109
      %v1111 = vpop.f32.mrb[0].mxu0
      %1112 = vmatprep.mubr.f32.mxu0 0.0
      %1113 = vmatmul.mubr.f32.gmra.mrb[0].mxu0 %v918
      %v1114 = vpop.f32.mrb[0].mxu0
      %v1115 = vadd.f32 0.0, %v1114
      %v1116 = vpop.f32.mrb[0].mxu0
      %1117 = vmatprep.mubr.f32.mxu0 0.0
      %1118 = vmatmul.mubr.f32.gmra.mrb[0].mxu0 %v921
      %v1119 = vpop.f32.mrb[0].mxu0
      %v1120 = vadd.f32 0.0, %v1119
      %v1121 = vpop.f32.mrb[0].mxu0
      %1122 = vmatprep.mubr.f32.mxu0 0.0
      %1123 = vmatmul.mubr.f32.gmra.mrb[0].mxu0 %v924
      %v1124 = vpop.f32.mrb[0].mxu0
      %v1125 = vadd.f32 0.0, %v1124
      %v1126 = vpop.f32.mrb[0].mxu0
      %1127 = vmatprep.mubr.f32.mxu0 0.0
      %1128 = vmatmul.mubr.f32.gmra.mrb[0].mxu0 %v927
      %v1129 = vpop.f32.mrb[0].mxu0
      %v1130 = vadd.f32 0.0, %v1129
      %v1131 = vpop.f32.mrb[0].mxu0
      %1132 = vmatprep.mubr.f32.mxu0 0.0
      %1133 = vmatmul.mubr.f32.gmra.mrb[0].mxu0 %v930
      %v1134 = vpop.f32.mrb[0].mxu0
      %v1135 = vadd.f32 0.0, %v1134
      %v1136 = vpop.f32.mrb[0].mxu0
      %1137 = vmatprep.mubr.f32.mxu0 0.0
      %1138 = vmatmul.mubr.f32.gmra.mrb[0].mxu0 %v933
      %v1139 = vpop.f32.mrb[0].mxu0
      %v1140 = vadd.f32 0.0, %v1139
      %v1141 = vpop.f32.mrb[0].mxu0
      %1142 = vmatprep.mubr.f32.mxu0 0.0
      %1143 = vmatmul.mubr.f32.gmra.mrb[0].mxu0 %v936
      %v1144 = vpop.f32.mrb[0].mxu0
      %v1145 = vadd.f32 0.0, %v1144
      %v1146 = vpop.f32.mrb[0].mxu0
      %1147 = vmatprep.mubr.f32.mxu0 0.0
      %1148 = vmatmul.mubr.f32.gmra.mrb[0].mxu0 %v939
      %v1149 = vpop.f32.mrb[0].mxu0
      %v1150 = vadd.f32 0.0, %v1149
      %v1151 = vpop.f32.mrb[0].mxu0
      %1152 = vmatprep.mubr.f32.mxu0 0.0
      %1153 = vmatmul.mubr.f32.gmra.mrb[0].mxu0 %v942
      %v1154 = vpop.f32.mrb[0].mxu0
      %v1155 = vadd.f32 0.0, %v1154
      %v1156 = vpop.f32.mrb[0].mxu0
      %1157 = vmatprep.mubr.f32.mxu0 0.0
      %1158 = vmatmul.mubr.f32.gmra.mrb[0].mxu0 %v945
      %v1159 = vpop.f32.mrb[0].mxu0
      %v1160 = vadd.f32 0.0, %v1159
      %v1161 = vpop.f32.mrb[0].mxu0
      %1162 = vmatprep.mubr.f32.mxu0 0.0
      %1163 = vmatmul.mubr.f32.gmra.mrb[0].mxu0 %v948
      %v1164 = vpop.f32.mrb[0].mxu0
      %v1165 = vadd.f32 0.0, %v1164
      %v1166 = vpop.f32.mrb[0].mxu0
      %1167 = vmatprep.mubr.f32.mxu0 0.0
      %1168 = vmatmul.mubr.f32.gmra.mrb[0].mxu0 %v951
      %v1169 = vpop.f32.mrb[0].mxu0
      %v1170 = vadd.f32 0.0, %v1169
      %v1171 = vpop.f32.mrb[0].mxu0
      %1172 = vmatprep.mubr.f32.mxu0 0.0
      %1173 = vmatmul.mubr.f32.gmra.mrb[0].mxu0 %v954
      %v1174 = vpop.f32.mrb[0].mxu0
      %v1175 = vadd.f32 0.0, %v1174
      %v1176 = vpop.f32.mrb[0].mxu0
      %1177 = vmatprep.mubr.f32.mxu0 0.0
      %1178 = vmatmul.mubr.f32.gmra.mrb[0].mxu0 %v957
      %v1179 = vpop.f32.mrb[0].mxu0
      %v1180 = vadd.f32 0.0, %v1179
      %v1181 = vpop.f32.mrb[0].mxu0
      %1182 = vmatprep.mubr.f32.mxu0 0.0
      %1183 = vmatmul.mubr.f32.gmra.mrb[0].mxu0 %v960
      %v1184 = vpop.f32.mrb[0].mxu0
      %v1185 = vadd.f32 0.0, %v1184
      %v1186 = vpop.f32.mrb[0].mxu0
      %1187 = vmatprep.mubr.f32.mxu0 0.0
      %1188 = vmatmul.mubr.f32.gmra.mrb[0].mxu0 %v963
      %v1189 = vpop.f32.mrb[0].mxu0
      %v1190 = vadd.f32 0.0, %v1189
      %v1191 = vpop.f32.mrb[0].mxu0
      %1192 = vdwg.mxu0
      %v1193 = vadd.f32 %v676, %v1035
      %v1194 = vadd.f32 %v681, %v1040
      %v1195 = vadd.f32 %v686, %v1045
      %v1196 = vadd.f32 %v691, %v1050
      %v1197 = vadd.f32 %v696, %v1055
      %v1198 = vadd.f32 %v701, %v1060
      %v1199 = vadd.f32 %v706, %v1065
      %v1200 = vadd.f32 %v711, %v1070
      %v1201 = vadd.f32 %v716, %v1075
      %v1202 = vadd.f32 %v721, %v1080
      %v1203 = vadd.f32 %v726, %v1085
      %v1204 = vadd.f32 %v731, %v1090
      %v1205 = vadd.f32 %v736, %v1095
      %v1206 = vadd.f32 %v741, %v1100
      %v1207 = vadd.f32 %v746, %v1105
      %v1208 = vadd.f32 %v751, %v1110
      %v1209 = vadd.f32 %v756, %v1115
      %v1210 = vadd.f32 %v761, %v1120
      %v1211 = vadd.f32 %v766, %v1125
      %v1212 = vadd.f32 %v771, %v1130
      %v1213 = vadd.f32 %v776, %v1135
      %v1214 = vadd.f32 %v781, %v1140
      %v1215 = vadd.f32 %v786, %v1145
      %v1216 = vadd.f32 %v791, %v1150
      %v1217 = vadd.f32 %v796, %v1155
      %v1218 = vadd.f32 %v801, %v1160
      %v1219 = vadd.f32 %v806, %v1165
      %v1220 = vadd.f32 %v811, %v1170
      %v1221 = vadd.f32 %v816, %v1175
      %v1222 = vadd.f32 %v821, %v1180
      %v1223 = vadd.f32 %v826, %v1185
      %v1224 = vadd.f32 %v831, %v1190
      %v1225 = vld [vmem:[%s2] sm:$0x1]
      %v1227 = vlaneseq
      %v1228 = vshrl.u32 %v1227, 7
      %v1229 = vsub.s32 0, %v1228
      %v1230 = vrot.slane %v1225, %v1229
      %v1232 = vmul.f32 %v1193, %v1230
      %v1233 = vmul.f32 %v1194, %v1230
      %v1234 = vmul.f32 %v1195, %v1230
      %v1235 = vmul.f32 %v1196, %v1230
      %v1236 = vmul.f32 %v1197, %v1230
      %v1237 = vmul.f32 %v1198, %v1230
      %v1238 = vmul.f32 %v1199, %v1230
      %v1239 = vmul.f32 %v1200, %v1230
      %v1240 = vmul.f32 %v1201, %v1230
      %v1241 = vmul.f32 %v1202, %v1230
      %v1242 = vmul.f32 %v1203, %v1230
      %v1243 = vmul.f32 %v1204, %v1230
      %v1244 = vmul.f32 %v1205, %v1230
      %v1245 = vmul.f32 %v1206, %v1230
      %v1246 = vmul.f32 %v1207, %v1230
      %v1247 = vmul.f32 %v1208, %v1230
      %v1248 = vmul.f32 %v1209, %v1230
      %v1249 = vmul.f32 %v1210, %v1230
      %v1250 = vmul.f32 %v1211, %v1230
      %v1251 = vmul.f32 %v1212, %v1230
      %v1252 = vmul.f32 %v1213, %v1230
      %v1253 = vmul.f32 %v1214, %v1230
      %v1254 = vmul.f32 %v1215, %v1230
      %v1255 = vmul.f32 %v1216, %v1230
      %v1256 = vmul.f32 %v1217, %v1230
      %v1257 = vmul.f32 %v1218, %v1230
      %v1258 = vmul.f32 %v1219, %v1230
      %v1259 = vmul.f32 %v1220, %v1230
      %v1260 = vmul.f32 %v1221, %v1230
      %v1261 = vmul.f32 %v1222, %v1230
      %v1262 = vmul.f32 %v1223, %v1230
      %v1263 = vmul.f32 %v1224, %v1230
      %v1264 = vld [vmem:[%s3] sm:$0x1]
      %v1266 = vlaneseq
      %v1267 = vshrl.u32 %v1266, 7
      %v1268 = vsub.s32 0, %v1267
      %v1269 = vrot.slane %v1264, %v1268
      %v1271 = vadd.f32 %v1232, %v1269
      %v1272 = vadd.f32 %v1233, %v1269
      %v1273 = vadd.f32 %v1234, %v1269
      %v1274 = vadd.f32 %v1235, %v1269
      %v1275 = vadd.f32 %v1236, %v1269
      %v1276 = vadd.f32 %v1237, %v1269
      %v1277 = vadd.f32 %v1238, %v1269
      %v1278 = vadd.f32 %v1239, %v1269
      %v1279 = vadd.f32 %v1240, %v1269
      %v1280 = vadd.f32 %v1241, %v1269
      %v1281 = vadd.f32 %v1242, %v1269
      %v1282 = vadd.f32 %v1243, %v1269
      %v1283 = vadd.f32 %v1244, %v1269
      %v1284 = vadd.f32 %v1245, %v1269
      %v1285 = vadd.f32 %v1246, %v1269
      %v1286 = vadd.f32 %v1247, %v1269
      %v1287 = vadd.f32 %v1248, %v1269
      %v1288 = vadd.f32 %v1249, %v1269
      %v1289 = vadd.f32 %v1250, %v1269
      %v1290 = vadd.f32 %v1251, %v1269
      %v1291 = vadd.f32 %v1252, %v1269
      %v1292 = vadd.f32 %v1253, %v1269
      %v1293 = vadd.f32 %v1254, %v1269
      %v1294 = vadd.f32 %v1255, %v1269
      %v1295 = vadd.f32 %v1256, %v1269
      %v1296 = vadd.f32 %v1257, %v1269
      %v1297 = vadd.f32 %v1258, %v1269
      %v1298 = vadd.f32 %v1259, %v1269
      %v1299 = vadd.f32 %v1260, %v1269
      %v1300 = vadd.f32 %v1261, %v1269
      %v1301 = vadd.f32 %v1262, %v1269
      %v1302 = vadd.f32 %v1263, %v1269
      %v1303 = vmul.f32 %v1271, 0.5
      %v1304 = vmul.f32 %v1272, 0.5
      %v1305 = vmul.f32 %v1273, 0.5
      %v1306 = vmul.f32 %v1274, 0.5
      %v1307 = vmul.f32 %v1275, 0.5
      %v1308 = vmul.f32 %v1276, 0.5
      %v1309 = vmul.f32 %v1277, 0.5
      %v1310 = vmul.f32 %v1278, 0.5
      %v1311 = vmul.f32 %v1279, 0.5
      %v1312 = vmul.f32 %v1280, 0.5
      %v1313 = vmul.f32 %v1281, 0.5
      %v1314 = vmul.f32 %v1282, 0.5
      %v1315 = vmul.f32 %v1283, 0.5
      %v1316 = vmul.f32 %v1284, 0.5
      %v1317 = vmul.f32 %v1285, 0.5
      %v1318 = vmul.f32 %v1286, 0.5
      %v1319 = vmul.f32 %v1287, 0.5
      %v1320 = vmul.f32 %v1288, 0.5
      %v1321 = vmul.f32 %v1289, 0.5
      %v1322 = vmul.f32 %v1290, 0.5
      %v1323 = vmul.f32 %v1291, 0.5
      %v1324 = vmul.f32 %v1292, 0.5
      %v1325 = vmul.f32 %v1293, 0.5
      %v1326 = vmul.f32 %v1294, 0.5
      %v1327 = vmul.f32 %v1295, 0.5
      %v1328 = vmul.f32 %v1296, 0.5
      %v1329 = vmul.f32 %v1297, 0.5
      %v1330 = vmul.f32 %v1298, 0.5
      %v1331 = vmul.f32 %v1299, 0.5
      %v1332 = vmul.f32 %v1300, 0.5
      %v1333 = vmul.f32 %v1301, 0.5
      %v1334 = vmul.f32 %v1302, 0.5
      %v1335 = vmul.f32 %v1271, 0.70710677
      %v1336 = vmul.f32 %v1272, 0.70710677
      %v1337 = vmul.f32 %v1273, 0.70710677
      %v1338 = vmul.f32 %v1274, 0.70710677
      %v1339 = vmul.f32 %v1275, 0.70710677
      %v1340 = vmul.f32 %v1276, 0.70710677
      %v1341 = vmul.f32 %v1277, 0.70710677
      %v1342 = vmul.f32 %v1278, 0.70710677
      %v1343 = vmul.f32 %v1279, 0.70710677
      %v1344 = vmul.f32 %v1280, 0.70710677
      %v1345 = vmul.f32 %v1281, 0.70710677
      %v1346 = vmul.f32 %v1282, 0.70710677
      %v1347 = vmul.f32 %v1283, 0.70710677
      %v1348 = vmul.f32 %v1284, 0.70710677
      %v1349 = vmul.f32 %v1285, 0.70710677
      %v1350 = vmul.f32 %v1286, 0.70710677
      %v1351 = vmul.f32 %v1287, 0.70710677
      %v1352 = vmul.f32 %v1288, 0.70710677
      %v1353 = vmul.f32 %v1289, 0.70710677
      %v1354 = vmul.f32 %v1290, 0.70710677
      %v1355 = vmul.f32 %v1291, 0.70710677
      %v1356 = vmul.f32 %v1292, 0.70710677
      %v1357 = vmul.f32 %v1293, 0.70710677
      %v1358 = vmul.f32 %v1294, 0.70710677
      %v1359 = vmul.f32 %v1295, 0.70710677
      %v1360 = vmul.f32 %v1296, 0.70710677
      %v1361 = vmul.f32 %v1297, 0.70710677
      %v1362 = vmul.f32 %v1298, 0.70710677
      %v1363 = vmul.f32 %v1299, 0.70710677
      %v1364 = vmul.f32 %v1300, 0.70710677
      %v1365 = vmul.f32 %v1301, 0.70710677
      %v1366 = vmul.f32 %v1302, 0.70710677
      %v1367 = vand.u32 2147483647, %v1335
      %v1368 = vand.u32 2147483647, %v1336
      %v1369 = vand.u32 2147483647, %v1337
      %v1370 = vand.u32 2147483647, %v1338
      %v1371 = vand.u32 2147483647, %v1339
      %v1372 = vand.u32 2147483647, %v1340
      %v1373 = vand.u32 2147483647, %v1341
      %v1374 = vand.u32 2147483647, %v1342
      %v1375 = vand.u32 2147483647, %v1343
      %v1376 = vand.u32 2147483647, %v1344
      %v1377 = vand.u32 2147483647, %v1345
      %v1378 = vand.u32 2147483647, %v1346
      %v1379 = vand.u32 2147483647, %v1347
      %v1380 = vand.u32 2147483647, %v1348
      %v1381 = vand.u32 2147483647, %v1349
      %v1382 = vand.u32 2147483647, %v1350
      %v1383 = vand.u32 2147483647, %v1351
      %v1384 = vand.u32 2147483647, %v1352
      %v1385 = vand.u32 2147483647, %v1353
      %v1386 = vand.u32 2147483647, %v1354
      %v1387 = vand.u32 2147483647, %v1355
      %v1388 = vand.u32 2147483647, %v1356
      %v1389 = vand.u32 2147483647, %v1357
      %v1390 = vand.u32 2147483647, %v1358
      %v1391 = vand.u32 2147483647, %v1359
      %v1392 = vand.u32 2147483647, %v1360
      %v1393 = vand.u32 2147483647, %v1361
      %v1394 = vand.u32 2147483647, %v1362
      %v1395 = vand.u32 2147483647, %v1363
      %v1396 = vand.u32 2147483647, %v1364
      %v1397 = vand.u32 2147483647, %v1365
      %v1398 = vand.u32 2147483647, %v1366
      %v1399 = vmul.f32 %v1367, 0.3275911
      %v1400 = vmul.f32 %v1368, 0.3275911
      %v1401 = vmul.f32 %v1369, 0.3275911
      %v1402 = vmul.f32 %v1370, 0.3275911
      %v1403 = vmul.f32 %v1371, 0.3275911
      %v1404 = vmul.f32 %v1372, 0.3275911
      %v1405 = vmul.f32 %v1373, 0.3275911
      %v1406 = vmul.f32 %v1374, 0.3275911
      %v1407 = vmul.f32 %v1375, 0.3275911
      %v1408 = vmul.f32 %v1376, 0.3275911
      %v1409 = vmul.f32 %v1377, 0.3275911
      %v1410 = vmul.f32 %v1378, 0.3275911
      %v1411 = vmul.f32 %v1379, 0.3275911
      %v1412 = vmul.f32 %v1380, 0.3275911
      %v1413 = vmul.f32 %v1381, 0.3275911
      %v1414 = vmul.f32 %v1382, 0.3275911
      %v1415 = vmul.f32 %v1383, 0.3275911
      %v1416 = vmul.f32 %v1384, 0.3275911
      %v1417 = vmul.f32 %v1385, 0.3275911
      %v1418 = vmul.f32 %v1386, 0.3275911
      %v1419 = vmul.f32 %v1387, 0.3275911
      %v1420 = vmul.f32 %v1388, 0.3275911
      %v1421 = vmul.f32 %v1389, 0.3275911
      %v1422 = vmul.f32 %v1390, 0.3275911
      %v1423 = vmul.f32 %v1391, 0.3275911
      %v1424 = vmul.f32 %v1392, 0.3275911
      %v1425 = vmul.f32 %v1393, 0.3275911
      %v1426 = vmul.f32 %v1394, 0.3275911
      %v1427 = vmul.f32 %v1395, 0.3275911
      %v1428 = vmul.f32 %v1396, 0.3275911
      %v1429 = vmul.f32 %v1397, 0.3275911
      %v1430 = vmul.f32 %v1398, 0.3275911
      %v1431 = vadd.f32 %v1399, 1.0
      %v1432 = vadd.f32 %v1400, 1.0
      %v1433 = vadd.f32 %v1401, 1.0
      %v1434 = vadd.f32 %v1402, 1.0
      %v1435 = vadd.f32 %v1403, 1.0
      %v1436 = vadd.f32 %v1404, 1.0
      %v1437 = vadd.f32 %v1405, 1.0
      %v1438 = vadd.f32 %v1406, 1.0
      %v1439 = vadd.f32 %v1407, 1.0
      %v1440 = vadd.f32 %v1408, 1.0
      %v1441 = vadd.f32 %v1409, 1.0
      %v1442 = vadd.f32 %v1410, 1.0
      %v1443 = vadd.f32 %v1411, 1.0
      %v1444 = vadd.f32 %v1412, 1.0
      %v1445 = vadd.f32 %v1413, 1.0
      %v1446 = vadd.f32 %v1414, 1.0
      %v1447 = vadd.f32 %v1415, 1.0
      %v1448 = vadd.f32 %v1416, 1.0
      %v1449 = vadd.f32 %v1417, 1.0
      %v1450 = vadd.f32 %v1418, 1.0
      %v1451 = vadd.f32 %v1419, 1.0
      %v1452 = vadd.f32 %v1420, 1.0
      %v1453 = vadd.f32 %v1421, 1.0
      %v1454 = vadd.f32 %v1422, 1.0
      %v1455 = vadd.f32 %v1423, 1.0
      %v1456 = vadd.f32 %v1424, 1.0
      %v1457 = vadd.f32 %v1425, 1.0
      %v1458 = vadd.f32 %v1426, 1.0
      %v1459 = vadd.f32 %v1427, 1.0
      %v1460 = vadd.f32 %v1428, 1.0
      %v1461 = vadd.f32 %v1429, 1.0
      %v1462 = vadd.f32 %v1430, 1.0
      %v1463 = vrcp.pop %v1431
      %v1464 = vmul.f32 1.0, %v1463
      %v1465 = vrcp.pop %v1432
      %v1466 = vmul.f32 1.0, %v1465
      %v1467 = vrcp.pop %v1433
      %v1468 = vmul.f32 1.0, %v1467
      %v1469 = vrcp.pop %v1434
      %v1470 = vmul.f32 1.0, %v1469
      %v1471 = vrcp.pop %v1435
      %v1472 = vmul.f32 1.0, %v1471
      %v1473 = vrcp.pop %v1436
      %v1474 = vmul.f32 1.0, %v1473
      %v1475 = vrcp.pop %v1437
      %v1476 = vmul.f32 1.0, %v1475
      %v1477 = vrcp.pop %v1438
      %v1478 = vmul.f32 1.0, %v1477
      %v1479 = vrcp.pop %v1439
      %v1480 = vmul.f32 1.0, %v1479
      %v1481 = vrcp.pop %v1440
      %v1482 = vmul.f32 1.0, %v1481
      %v1483 = vrcp.pop %v1441
      %v1484 = vmul.f32 1.0, %v1483
      %v1485 = vrcp.pop %v1442
      %v1486 = vmul.f32 1.0, %v1485
      %v1487 = vrcp.pop %v1443
      %v1488 = vmul.f32 1.0, %v1487
      %v1489 = vrcp.pop %v1444
      %v1490 = vmul.f32 1.0, %v1489
      %v1491 = vrcp.pop %v1445
      %v1492 = vmul.f32 1.0, %v1491
      %v1493 = vrcp.pop %v1446
      %v1494 = vmul.f32 1.0, %v1493
      %v1495 = vrcp.pop %v1447
      %v1496 = vmul.f32 1.0, %v1495
      %v1497 = vrcp.pop %v1448
      %v1498 = vmul.f32 1.0, %v1497
      %v1499 = vrcp.pop %v1449
      %v1500 = vmul.f32 1.0, %v1499
      %v1501 = vrcp.pop %v1450
      %v1502 = vmul.f32 1.0, %v1501
      %v1503 = vrcp.pop %v1451
      %v1504 = vmul.f32 1.0, %v1503
      %v1505 = vrcp.pop %v1452
      %v1506 = vmul.f32 1.0, %v1505
      %v1507 = vrcp.pop %v1453
      %v1508 = vmul.f32 1.0, %v1507
      %v1509 = vrcp.pop %v1454
      %v1510 = vmul.f32 1.0, %v1509
      %v1511 = vrcp.pop %v1455
      %v1512 = vmul.f32 1.0, %v1511
      %v1513 = vrcp.pop %v1456
      %v1514 = vmul.f32 1.0, %v1513
      %v1515 = vrcp.pop %v1457
      %v1516 = vmul.f32 1.0, %v1515
      %v1517 = vrcp.pop %v1458
      %v1518 = vmul.f32 1.0, %v1517
      %v1519 = vrcp.pop %v1459
      %v1520 = vmul.f32 1.0, %v1519
      %v1521 = vrcp.pop %v1460
      %v1522 = vmul.f32 1.0, %v1521
      %v1523 = vrcp.pop %v1461
      %v1524 = vmul.f32 1.0, %v1523
      %v1525 = vrcp.pop %v1462
      %v1526 = vmul.f32 1.0, %v1525
      %v1527 = vmul.f32 %v1464, 1.0614054
      %v1528 = vmul.f32 %v1466, 1.0614054
      %v1529 = vmul.f32 %v1468, 1.0614054
      %v1530 = vmul.f32 %v1470, 1.0614054
      %v1531 = vmul.f32 %v1472, 1.0614054
      %v1532 = vmul.f32 %v1474, 1.0614054
      %v1533 = vmul.f32 %v1476, 1.0614054
      %v1534 = vmul.f32 %v1478, 1.0614054
      %v1535 = vmul.f32 %v1480, 1.0614054
      %v1536 = vmul.f32 %v1482, 1.0614054
      %v1537 = vmul.f32 %v1484, 1.0614054
      %v1538 = vmul.f32 %v1486, 1.0614054
      %v1539 = vmul.f32 %v1488, 1.0614054
      %v1540 = vmul.f32 %v1490, 1.0614054
      %v1541 = vmul.f32 %v1492, 1.0614054
      %v1542 = vmul.f32 %v1494, 1.0614054
      %v1543 = vmul.f32 %v1496, 1.0614054
      %v1544 = vmul.f32 %v1498, 1.0614054
      %v1545 = vmul.f32 %v1500, 1.0614054
      %v1546 = vmul.f32 %v1502, 1.0614054
      %v1547 = vmul.f32 %v1504, 1.0614054
      %v1548 = vmul.f32 %v1506, 1.0614054
      %v1549 = vmul.f32 %v1508, 1.0614054
      %v1550 = vmul.f32 %v1510, 1.0614054
      %v1551 = vmul.f32 %v1512, 1.0614054
      %v1552 = vmul.f32 %v1514, 1.0614054
      %v1553 = vmul.f32 %v1516, 1.0614054
      %v1554 = vmul.f32 %v1518, 1.0614054
      %v1555 = vmul.f32 %v1520, 1.0614054
      %v1556 = vmul.f32 %v1522, 1.0614054
      %v1557 = vmul.f32 %v1524, 1.0614054
      %v1558 = vmul.f32 %v1526, 1.0614054
      %v1559 = vadd.f32 %v1527, -1.4531521
      %v1560 = vadd.f32 %v1528, -1.4531521
      %v1561 = vadd.f32 %v1529, -1.4531521
      %v1562 = vadd.f32 %v1530, -1.4531521
      %v1563 = vadd.f32 %v1531, -1.4531521
      %v1564 = vadd.f32 %v1532, -1.4531521
      %v1565 = vadd.f32 %v1533, -1.4531521
      %v1566 = vadd.f32 %v1534, -1.4531521
      %v1567 = vadd.f32 %v1535, -1.4531521
      %v1568 = vadd.f32 %v1536, -1.4531521
      %v1569 = vadd.f32 %v1537, -1.4531521
      %v1570 = vadd.f32 %v1538, -1.4531521
      %v1571 = vadd.f32 %v1539, -1.4531521
      %v1572 = vadd.f32 %v1540, -1.4531521
      %v1573 = vadd.f32 %v1541, -1.4531521
      %v1574 = vadd.f32 %v1542, -1.4531521
      %v1575 = vadd.f32 %v1543, -1.4531521
      %v1576 = vadd.f32 %v1544, -1.4531521
      %v1577 = vadd.f32 %v1545, -1.4531521
      %v1578 = vadd.f32 %v1546, -1.4531521
      %v1579 = vadd.f32 %v1547, -1.4531521
      %v1580 = vadd.f32 %v1548, -1.4531521
      %v1581 = vadd.f32 %v1549, -1.4531521
      %v1582 = vadd.f32 %v1550, -1.4531521
      %v1583 = vadd.f32 %v1551, -1.4531521
      %v1584 = vadd.f32 %v1552, -1.4531521
      %v1585 = vadd.f32 %v1553, -1.4531521
      %v1586 = vadd.f32 %v1554, -1.4531521
      %v1587 = vadd.f32 %v1555, -1.4531521
      %v1588 = vadd.f32 %v1556, -1.4531521
      %v1589 = vadd.f32 %v1557, -1.4531521
      %v1590 = vadd.f32 %v1558, -1.4531521
      %v1591 = vmul.f32 %v1559, %v1464
      %v1592 = vmul.f32 %v1560, %v1466
      %v1593 = vmul.f32 %v1561, %v1468
      %v1594 = vmul.f32 %v1562, %v1470
      %v1595 = vmul.f32 %v1563, %v1472
      %v1596 = vmul.f32 %v1564, %v1474
      %v1597 = vmul.f32 %v1565, %v1476
      %v1598 = vmul.f32 %v1566, %v1478
      %v1599 = vmul.f32 %v1567, %v1480
      %v1600 = vmul.f32 %v1568, %v1482
      %v1601 = vmul.f32 %v1569, %v1484
      %v1602 = vmul.f32 %v1570, %v1486
      %v1603 = vmul.f32 %v1571, %v1488
      %v1604 = vmul.f32 %v1572, %v1490
      %v1605 = vmul.f32 %v1573, %v1492
      %v1606 = vmul.f32 %v1574, %v1494
      %v1607 = vmul.f32 %v1575, %v1496
      %v1608 = vmul.f32 %v1576, %v1498
      %v1609 = vmul.f32 %v1577, %v1500
      %v1610 = vmul.f32 %v1578, %v1502
      %v1611 = vmul.f32 %v1579, %v1504
      %v1612 = vmul.f32 %v1580, %v1506
      %v1613 = vmul.f32 %v1581, %v1508
      %v1614 = vmul.f32 %v1582, %v1510
      %v1615 = vmul.f32 %v1583, %v1512
      %v1616 = vmul.f32 %v1584, %v1514
      %v1617 = vmul.f32 %v1585, %v1516
      %v1618 = vmul.f32 %v1586, %v1518
      %v1619 = vmul.f32 %v1587, %v1520
      %v1620 = vmul.f32 %v1588, %v1522
      %v1621 = vmul.f32 %v1589, %v1524
      %v1622 = vmul.f32 %v1590, %v1526
      %v1623 = vadd.f32 %v1591, 1.4214138
      %v1624 = vadd.f32 %v1592, 1.4214138
      %v1625 = vadd.f32 %v1593, 1.4214138
      %v1626 = vadd.f32 %v1594, 1.4214138
      %v1627 = vadd.f32 %v1595, 1.4214138
      %v1628 = vadd.f32 %v1596, 1.4214138
      %v1629 = vadd.f32 %v1597, 1.4214138
      %v1630 = vadd.f32 %v1598, 1.4214138
      %v1631 = vadd.f32 %v1599, 1.4214138
      %v1632 = vadd.f32 %v1600, 1.4214138
      %v1633 = vadd.f32 %v1601, 1.4214138
      %v1634 = vadd.f32 %v1602, 1.4214138
      %v1635 = vadd.f32 %v1603, 1.4214138
      %v1636 = vadd.f32 %v1604, 1.4214138
      %v1637 = vadd.f32 %v1605, 1.4214138
      %v1638 = vadd.f32 %v1606, 1.4214138
      %v1639 = vadd.f32 %v1607, 1.4214138
      %v1640 = vadd.f32 %v1608, 1.4214138
      %v1641 = vadd.f32 %v1609, 1.4214138
      %v1642 = vadd.f32 %v1610, 1.4214138
      %v1643 = vadd.f32 %v1611, 1.4214138
      %v1644 = vadd.f32 %v1612, 1.4214138
      %v1645 = vadd.f32 %v1613, 1.4214138
      %v1646 = vadd.f32 %v1614, 1.4214138
      %v1647 = vadd.f32 %v1615, 1.4214138
      %v1648 = vadd.f32 %v1616, 1.4214138
      %v1649 = vadd.f32 %v1617, 1.4214138
      %v1650 = vadd.f32 %v1618, 1.4214138
      %v1651 = vadd.f32 %v1619, 1.4214138
      %v1652 = vadd.f32 %v1620, 1.4214138
      %v1653 = vadd.f32 %v1621, 1.4214138
      %v1654 = vadd.f32 %v1622, 1.4214138
      %v1655 = vmul.f32 %v1623, %v1464
      %v1656 = vmul.f32 %v1624, %v1466
      %v1657 = vmul.f32 %v1625, %v1468
      %v1658 = vmul.f32 %v1626, %v1470
      %v1659 = vmul.f32 %v1627, %v1472
      %v1660 = vmul.f32 %v1628, %v1474
      %v1661 = vmul.f32 %v1629, %v1476
      %v1662 = vmul.f32 %v1630, %v1478
      %v1663 = vmul.f32 %v1631, %v1480
      %v1664 = vmul.f32 %v1632, %v1482
      %v1665 = vmul.f32 %v1633, %v1484
      %v1666 = vmul.f32 %v1634, %v1486
      %v1667 = vmul.f32 %v1635, %v1488
      %v1668 = vmul.f32 %v1636, %v1490
      %v1669 = vmul.f32 %v1637, %v1492
      %v1670 = vmul.f32 %v1638, %v1494
      %v1671 = vmul.f32 %v1639, %v1496
      %v1672 = vmul.f32 %v1640, %v1498
      %v1673 = vmul.f32 %v1641, %v1500
      %v1674 = vmul.f32 %v1642, %v1502
      %v1675 = vmul.f32 %v1643, %v1504
      %v1676 = vmul.f32 %v1644, %v1506
      %v1677 = vmul.f32 %v1645, %v1508
      %v1678 = vmul.f32 %v1646, %v1510
      %v1679 = vmul.f32 %v1647, %v1512
      %v1680 = vmul.f32 %v1648, %v1514
      %v1681 = vmul.f32 %v1649, %v1516
      %v1682 = vmul.f32 %v1650, %v1518
      %v1683 = vmul.f32 %v1651, %v1520
      %v1684 = vmul.f32 %v1652, %v1522
      %v1685 = vmul.f32 %v1653, %v1524
      %v1686 = vmul.f32 %v1654, %v1526
      %v1687 = vadd.f32 %v1655, -0.28449672
      %v1688 = vadd.f32 %v1656, -0.28449672
      %v1689 = vadd.f32 %v1657, -0.28449672
      %v1690 = vadd.f32 %v1658, -0.28449672
      %v1691 = vadd.f32 %v1659, -0.28449672
      %v1692 = vadd.f32 %v1660, -0.28449672
      %v1693 = vadd.f32 %v1661, -0.28449672
      %v1694 = vadd.f32 %v1662, -0.28449672
      %v1695 = vadd.f32 %v1663, -0.28449672
      %v1696 = vadd.f32 %v1664, -0.28449672
      %v1697 = vadd.f32 %v1665, -0.28449672
      %v1698 = vadd.f32 %v1666, -0.28449672
      %v1699 = vadd.f32 %v1667, -0.28449672
      %v1700 = vadd.f32 %v1668, -0.28449672
      %v1701 = vadd.f32 %v1669, -0.28449672
      %v1702 = vadd.f32 %v1670, -0.28449672
      %v1703 = vadd.f32 %v1671, -0.28449672
      %v1704 = vadd.f32 %v1672, -0.28449672
      %v1705 = vadd.f32 %v1673, -0.28449672
      %v1706 = vadd.f32 %v1674, -0.28449672
      %v1707 = vadd.f32 %v1675, -0.28449672
      %v1708 = vadd.f32 %v1676, -0.28449672
      %v1709 = vadd.f32 %v1677, -0.28449672
      %v1710 = vadd.f32 %v1678, -0.28449672
      %v1711 = vadd.f32 %v1679, -0.28449672
      %v1712 = vadd.f32 %v1680, -0.28449672
      %v1713 = vadd.f32 %v1681, -0.28449672
      %v1714 = vadd.f32 %v1682, -0.28449672
      %v1715 = vadd.f32 %v1683, -0.28449672
      %v1716 = vadd.f32 %v1684, -0.28449672
      %v1717 = vadd.f32 %v1685, -0.28449672
      %v1718 = vadd.f32 %v1686, -0.28449672
      %v1719 = vmul.f32 %v1687, %v1464
      %v1720 = vmul.f32 %v1688, %v1466
      %v1721 = vmul.f32 %v1689, %v1468
      %v1722 = vmul.f32 %v1690, %v1470
      %v1723 = vmul.f32 %v1691, %v1472
      %v1724 = vmul.f32 %v1692, %v1474
      %v1725 = vmul.f32 %v1693, %v1476
      %v1726 = vmul.f32 %v1694, %v1478
      %v1727 = vmul.f32 %v1695, %v1480
      %v1728 = vmul.f32 %v1696, %v1482
      %v1729 = vmul.f32 %v1697, %v1484
      %v1730 = vmul.f32 %v1698, %v1486
      %v1731 = vmul.f32 %v1699, %v1488
      %v1732 = vmul.f32 %v1700, %v1490
      %v1733 = vmul.f32 %v1701, %v1492
      %v1734 = vmul.f32 %v1702, %v1494
      %v1735 = vmul.f32 %v1703, %v1496
      %v1736 = vmul.f32 %v1704, %v1498
      %v1737 = vmul.f32 %v1705, %v1500
      %v1738 = vmul.f32 %v1706, %v1502
      %v1739 = vmul.f32 %v1707, %v1504
      %v1740 = vmul.f32 %v1708, %v1506
      %v1741 = vmul.f32 %v1709, %v1508
      %v1742 = vmul.f32 %v1710, %v1510
      %v1743 = vmul.f32 %v1711, %v1512
      %v1744 = vmul.f32 %v1712, %v1514
      %v1745 = vmul.f32 %v1713, %v1516
      %v1746 = vmul.f32 %v1714, %v1518
      %v1747 = vmul.f32 %v1715, %v1520
      %v1748 = vmul.f32 %v1716, %v1522
      %v1749 = vmul.f32 %v1717, %v1524
      %v1750 = vmul.f32 %v1718, %v1526
      %v1751 = vadd.f32 %v1719, 0.2548296
      %v1752 = vadd.f32 %v1720, 0.2548296
      %v1753 = vadd.f32 %v1721, 0.2548296
      %v1754 = vadd.f32 %v1722, 0.2548296
      %v1755 = vadd.f32 %v1723, 0.2548296
      %v1756 = vadd.f32 %v1724, 0.2548296
      %v1757 = vadd.f32 %v1725, 0.2548296
      %v1758 = vadd.f32 %v1726, 0.2548296
      %v1759 = vadd.f32 %v1727, 0.2548296
      %v1760 = vadd.f32 %v1728, 0.2548296
      %v1761 = vadd.f32 %v1729, 0.2548296
      %v1762 = vadd.f32 %v1730, 0.2548296
      %v1763 = vadd.f32 %v1731, 0.2548296
      %v1764 = vadd.f32 %v1732, 0.2548296
      %v1765 = vadd.f32 %v1733, 0.2548296
      %v1766 = vadd.f32 %v1734, 0.2548296
      %v1767 = vadd.f32 %v1735, 0.2548296
      %v1768 = vadd.f32 %v1736, 0.2548296
      %v1769 = vadd.f32 %v1737, 0.2548296
      %v1770 = vadd.f32 %v1738, 0.2548296
      %v1771 = vadd.f32 %v1739, 0.2548296
      %v1772 = vadd.f32 %v1740, 0.2548296
      %v1773 = vadd.f32 %v1741, 0.2548296
      %v1774 = vadd.f32 %v1742, 0.2548296
      %v1775 = vadd.f32 %v1743, 0.2548296
      %v1776 = vadd.f32 %v1744, 0.2548296
      %v1777 = vadd.f32 %v1745, 0.2548296
      %v1778 = vadd.f32 %v1746, 0.2548296
      %v1779 = vadd.f32 %v1747, 0.2548296
      %v1780 = vadd.f32 %v1748, 0.2548296
      %v1781 = vadd.f32 %v1749, 0.2548296
      %v1782 = vadd.f32 %v1750, 0.2548296
      %v1783 = vmul.f32 %v1751, %v1464
      %v1784 = vmul.f32 %v1752, %v1466
      %v1785 = vmul.f32 %v1753, %v1468
      %v1786 = vmul.f32 %v1754, %v1470
      %v1787 = vmul.f32 %v1755, %v1472
      %v1788 = vmul.f32 %v1756, %v1474
      %v1789 = vmul.f32 %v1757, %v1476
      %v1790 = vmul.f32 %v1758, %v1478
      %v1791 = vmul.f32 %v1759, %v1480
      %v1792 = vmul.f32 %v1760, %v1482
      %v1793 = vmul.f32 %v1761, %v1484
      %v1794 = vmul.f32 %v1762, %v1486
      %v1795 = vmul.f32 %v1763, %v1488
      %v1796 = vmul.f32 %v1764, %v1490
      %v1797 = vmul.f32 %v1765, %v1492
      %v1798 = vmul.f32 %v1766, %v1494
      %v1799 = vmul.f32 %v1767, %v1496
      %v1800 = vmul.f32 %v1768, %v1498
      %v1801 = vmul.f32 %v1769, %v1500
      %v1802 = vmul.f32 %v1770, %v1502
      %v1803 = vmul.f32 %v1771, %v1504
      %v1804 = vmul.f32 %v1772, %v1506
      %v1805 = vmul.f32 %v1773, %v1508
      %v1806 = vmul.f32 %v1774, %v1510
      %v1807 = vmul.f32 %v1775, %v1512
      %v1808 = vmul.f32 %v1776, %v1514
      %v1809 = vmul.f32 %v1777, %v1516
      %v1810 = vmul.f32 %v1778, %v1518
      %v1811 = vmul.f32 %v1779, %v1520
      %v1812 = vmul.f32 %v1780, %v1522
      %v1813 = vmul.f32 %v1781, %v1524
      %v1814 = vmul.f32 %v1782, %v1526
      %v1815 = vsub.f32 0.0, %v1367
      %v1816 = vsub.f32 0.0, %v1368
      %v1817 = vsub.f32 0.0, %v1369
      %v1818 = vsub.f32 0.0, %v1370
      %v1819 = vsub.f32 0.0, %v1371
      %v1820 = vsub.f32 0.0, %v1372
      %v1821 = vsub.f32 0.0, %v1373
      %v1822 = vsub.f32 0.0, %v1374
      %v1823 = vsub.f32 0.0, %v1375
      %v1824 = vsub.f32 0.0, %v1376
      %v1825 = vsub.f32 0.0, %v1377
      %v1826 = vsub.f32 0.0, %v1378
      %v1827 = vsub.f32 0.0, %v1379
      %v1828 = vsub.f32 0.0, %v1380
      %v1829 = vsub.f32 0.0, %v1381
      %v1830 = vsub.f32 0.0, %v1382
      %v1831 = vsub.f32 0.0, %v1383
      %v1832 = vsub.f32 0.0, %v1384
      %v1833 = vsub.f32 0.0, %v1385
      %v1834 = vsub.f32 0.0, %v1386
      %v1835 = vsub.f32 0.0, %v1387
      %v1836 = vsub.f32 0.0, %v1388
      %v1837 = vsub.f32 0.0, %v1389
      %v1838 = vsub.f32 0.0, %v1390
      %v1839 = vsub.f32 0.0, %v1391
      %v1840 = vsub.f32 0.0, %v1392
      %v1841 = vsub.f32 0.0, %v1393
      %v1842 = vsub.f32 0.0, %v1394
      %v1843 = vsub.f32 0.0, %v1395
      %v1844 = vsub.f32 0.0, %v1396
      %v1845 = vsub.f32 0.0, %v1397
      %v1846 = vsub.f32 0.0, %v1398
      %v1847 = vmul.f32 %v1815, %v1367
      %v1848 = vmul.f32 %v1816, %v1368
      %v1849 = vmul.f32 %v1817, %v1369
      %v1850 = vmul.f32 %v1818, %v1370
      %v1851 = vmul.f32 %v1819, %v1371
      %v1852 = vmul.f32 %v1820, %v1372
      %v1853 = vmul.f32 %v1821, %v1373
      %v1854 = vmul.f32 %v1822, %v1374
      %v1855 = vmul.f32 %v1823, %v1375
      %v1856 = vmul.f32 %v1824, %v1376
      %v1857 = vmul.f32 %v1825, %v1377
      %v1858 = vmul.f32 %v1826, %v1378
      %v1859 = vmul.f32 %v1827, %v1379
      %v1860 = vmul.f32 %v1828, %v1380
      %v1861 = vmul.f32 %v1829, %v1381
      %v1862 = vmul.f32 %v1830, %v1382
      %v1863 = vmul.f32 %v1831, %v1383
      %v1864 = vmul.f32 %v1832, %v1384
      %v1865 = vmul.f32 %v1833, %v1385
      %v1866 = vmul.f32 %v1834, %v1386
      %v1867 = vmul.f32 %v1835, %v1387
      %v1868 = vmul.f32 %v1836, %v1388
      %v1869 = vmul.f32 %v1837, %v1389
      %v1870 = vmul.f32 %v1838, %v1390
      %v1871 = vmul.f32 %v1839, %v1391
      %v1872 = vmul.f32 %v1840, %v1392
      %v1873 = vmul.f32 %v1841, %v1393
      %v1874 = vmul.f32 %v1842, %v1394
      %v1875 = vmul.f32 %v1843, %v1395
      %v1876 = vmul.f32 %v1844, %v1396
      %v1877 = vmul.f32 %v1845, %v1397
      %v1878 = vmul.f32 %v1846, %v1398
      %v1879 = vmul.f32 %v1847, 1.442695
      %v1880 = vpow.pop %v1879
      %v1881 = vmul.f32 %v1848, 1.442695
      %v1882 = vpow.pop %v1881
      %v1883 = vmul.f32 %v1849, 1.442695
      %v1884 = vpow.pop %v1883
      %v1885 = vmul.f32 %v1850, 1.442695
      %v1886 = vpow.pop %v1885
      %v1887 = vmul.f32 %v1851, 1.442695
      %v1888 = vpow.pop %v1887
      %v1889 = vmul.f32 %v1852, 1.442695
      %v1890 = vpow.pop %v1889
      %v1891 = vmul.f32 %v1853, 1.442695
      %v1892 = vpow.pop %v1891
      %v1893 = vmul.f32 %v1854, 1.442695
      %v1894 = vpow.pop %v1893
      %v1895 = vmul.f32 %v1855, 1.442695
      %v1896 = vpow.pop %v1895
      %v1897 = vmul.f32 %v1856, 1.442695
      %v1898 = vpow.pop %v1897
      %v1899 = vmul.f32 %v1857, 1.442695
      %v1900 = vpow.pop %v1899
      %v1901 = vmul.f32 %v1858, 1.442695
      %v1902 = vpow.pop %v1901
      %v1903 = vmul.f32 %v1859, 1.442695
      %v1904 = vpow.pop %v1903
      %v1905 = vmul.f32 %v1860, 1.442695
      %v1906 = vpow.pop %v1905
      %v1907 = vmul.f32 %v1861, 1.442695
      %v1908 = vpow.pop %v1907
      %v1909 = vmul.f32 %v1862, 1.442695
      %v1910 = vpow.pop %v1909
      %v1911 = vmul.f32 %v1863, 1.442695
      %v1912 = vpow.pop %v1911
      %v1913 = vmul.f32 %v1864, 1.442695
      %v1914 = vpow.pop %v1913
      %v1915 = vmul.f32 %v1865, 1.442695
      %v1916 = vpow.pop %v1915
      %v1917 = vmul.f32 %v1866, 1.442695
      %v1918 = vpow.pop %v1917
      %v1919 = vmul.f32 %v1867, 1.442695
      %v1920 = vpow.pop %v1919
      %v1921 = vmul.f32 %v1868, 1.442695
      %v1922 = vpow.pop %v1921
      %v1923 = vmul.f32 %v1869, 1.442695
      %v1924 = vpow.pop %v1923
      %v1925 = vmul.f32 %v1870, 1.442695
      %v1926 = vpow.pop %v1925
      %v1927 = vmul.f32 %v1871, 1.442695
      %v1928 = vpow.pop %v1927
      %v1929 = vmul.f32 %v1872, 1.442695
      %v1930 = vpow.pop %v1929
      %v1931 = vmul.f32 %v1873, 1.442695
      %v1932 = vpow.pop %v1931
      %v1933 = vmul.f32 %v1874, 1.442695
      %v1934 = vpow.pop %v1933
      %v1935 = vmul.f32 %v1875, 1.442695
      %v1936 = vpow.pop %v1935
      %v1937 = vmul.f32 %v1876, 1.442695
      %v1938 = vpow.pop %v1937
      %v1939 = vmul.f32 %v1877, 1.442695
      %v1940 = vpow.pop %v1939
      %v1941 = vmul.f32 %v1878, 1.442695
      %v1942 = vpow.pop %v1941
      %v1943 = vmul.f32 %v1783, %v1880
      %v1944 = vmul.f32 %v1784, %v1882
      %v1945 = vmul.f32 %v1785, %v1884
      %v1946 = vmul.f32 %v1786, %v1886
      %v1947 = vmul.f32 %v1787, %v1888
      %v1948 = vmul.f32 %v1788, %v1890
      %v1949 = vmul.f32 %v1789, %v1892
      %v1950 = vmul.f32 %v1790, %v1894
      %v1951 = vmul.f32 %v1791, %v1896
      %v1952 = vmul.f32 %v1792, %v1898
      %v1953 = vmul.f32 %v1793, %v1900
      %v1954 = vmul.f32 %v1794, %v1902
      %v1955 = vmul.f32 %v1795, %v1904
      %v1956 = vmul.f32 %v1796, %v1906
      %v1957 = vmul.f32 %v1797, %v1908
      %v1958 = vmul.f32 %v1798, %v1910
      %v1959 = vmul.f32 %v1799, %v1912
      %v1960 = vmul.f32 %v1800, %v1914
      %v1961 = vmul.f32 %v1801, %v1916
      %v1962 = vmul.f32 %v1802, %v1918
      %v1963 = vmul.f32 %v1803, %v1920
      %v1964 = vmul.f32 %v1804, %v1922
      %v1965 = vmul.f32 %v1805, %v1924
      %v1966 = vmul.f32 %v1806, %v1926
      %v1967 = vmul.f32 %v1807, %v1928
      %v1968 = vmul.f32 %v1808, %v1930
      %v1969 = vmul.f32 %v1809, %v1932
      %v1970 = vmul.f32 %v1810, %v1934
      %v1971 = vmul.f32 %v1811, %v1936
      %v1972 = vmul.f32 %v1812, %v1938
      %v1973 = vmul.f32 %v1813, %v1940
      %v1974 = vmul.f32 %v1814, %v1942
      %v1975 = vsub.f32 1.0, %v1943
      %v1976 = vsub.f32 1.0, %v1944
      %v1977 = vsub.f32 1.0, %v1945
      %v1978 = vsub.f32 1.0, %v1946
      %v1979 = vsub.f32 1.0, %v1947
      %v1980 = vsub.f32 1.0, %v1948
      %v1981 = vsub.f32 1.0, %v1949
      %v1982 = vsub.f32 1.0, %v1950
      %v1983 = vsub.f32 1.0, %v1951
      %v1984 = vsub.f32 1.0, %v1952
      %v1985 = vsub.f32 1.0, %v1953
      %v1986 = vsub.f32 1.0, %v1954
      %v1987 = vsub.f32 1.0, %v1955
      %v1988 = vsub.f32 1.0, %v1956
      %v1989 = vsub.f32 1.0, %v1957
      %v1990 = vsub.f32 1.0, %v1958
      %v1991 = vsub.f32 1.0, %v1959
      %v1992 = vsub.f32 1.0, %v1960
      %v1993 = vsub.f32 1.0, %v1961
      %v1994 = vsub.f32 1.0, %v1962
      %v1995 = vsub.f32 1.0, %v1963
      %v1996 = vsub.f32 1.0, %v1964
      %v1997 = vsub.f32 1.0, %v1965
      %v1998 = vsub.f32 1.0, %v1966
      %v1999 = vsub.f32 1.0, %v1967
      %v2000 = vsub.f32 1.0, %v1968
      %v2001 = vsub.f32 1.0, %v1969
      %v2002 = vsub.f32 1.0, %v1970
      %v2003 = vsub.f32 1.0, %v1971
      %v2004 = vsub.f32 1.0, %v1972
      %v2005 = vsub.f32 1.0, %v1973
      %v2006 = vsub.f32 1.0, %v1974
      %vm2007 = vcmp.ge.f32.partialorder %v1335, 0.0
      %vm2008 = vcmp.ge.f32.partialorder %v1336, 0.0
      %vm2009 = vcmp.ge.f32.partialorder %v1337, 0.0
      %vm2010 = vcmp.ge.f32.partialorder %v1338, 0.0
      %vm2011 = vcmp.ge.f32.partialorder %v1339, 0.0
      %vm2012 = vcmp.ge.f32.partialorder %v1340, 0.0
      %vm2013 = vcmp.ge.f32.partialorder %v1341, 0.0
      %vm2014 = vcmp.ge.f32.partialorder %v1342, 0.0
      %vm2015 = vcmp.ge.f32.partialorder %v1343, 0.0
      %vm2016 = vcmp.ge.f32.partialorder %v1344, 0.0
      %vm2017 = vcmp.ge.f32.partialorder %v1345, 0.0
      %vm2018 = vcmp.ge.f32.partialorder %v1346, 0.0
      %vm2019 = vcmp.ge.f32.partialorder %v1347, 0.0
      %vm2020 = vcmp.ge.f32.partialorder %v1348, 0.0
      %vm2021 = vcmp.ge.f32.partialorder %v1349, 0.0
      %vm2022 = vcmp.ge.f32.partialorder %v1350, 0.0
      %vm2023 = vcmp.ge.f32.partialorder %v1351, 0.0
      %vm2024 = vcmp.ge.f32.partialorder %v1352, 0.0
      %vm2025 = vcmp.ge.f32.partialorder %v1353, 0.0
      %vm2026 = vcmp.ge.f32.partialorder %v1354, 0.0
      %vm2027 = vcmp.ge.f32.partialorder %v1355, 0.0
      %vm2028 = vcmp.ge.f32.partialorder %v1356, 0.0
      %vm2029 = vcmp.ge.f32.partialorder %v1357, 0.0
      %vm2030 = vcmp.ge.f32.partialorder %v1358, 0.0
      %vm2031 = vcmp.ge.f32.partialorder %v1359, 0.0
      %vm2032 = vcmp.ge.f32.partialorder %v1360, 0.0
      %vm2033 = vcmp.ge.f32.partialorder %v1361, 0.0
      %vm2034 = vcmp.ge.f32.partialorder %v1362, 0.0
      %vm2035 = vcmp.ge.f32.partialorder %v1363, 0.0
      %vm2036 = vcmp.ge.f32.partialorder %v1364, 0.0
      %vm2037 = vcmp.ge.f32.partialorder %v1365, 0.0
      %vm2038 = vcmp.ge.f32.partialorder %v1366, 0.0
      %v2039 = vsub.f32 0.0, %v1975
      %v2040 = vsub.f32 0.0, %v1976
      %v2041 = vsub.f32 0.0, %v1977
      %v2042 = vsub.f32 0.0, %v1978
      %v2043 = vsub.f32 0.0, %v1979
      %v2044 = vsub.f32 0.0, %v1980
      %v2045 = vsub.f32 0.0, %v1981
      %v2046 = vsub.f32 0.0, %v1982
      %v2047 = vsub.f32 0.0, %v1983
      %v2048 = vsub.f32 0.0, %v1984
      %v2049 = vsub.f32 0.0, %v1985
      %v2050 = vsub.f32 0.0, %v1986
      %v2051 = vsub.f32 0.0, %v1987
      %v2052 = vsub.f32 0.0, %v1988
      %v2053 = vsub.f32 0.0, %v1989
      %v2054 = vsub.f32 0.0, %v1990
      %v2055 = vsub.f32 0.0, %v1991
      %v2056 = vsub.f32 0.0, %v1992
      %v2057 = vsub.f32 0.0, %v1993
      %v2058 = vsub.f32 0.0, %v1994
      %v2059 = vsub.f32 0.0, %v1995
      %v2060 = vsub.f32 0.0, %v1996
      %v2061 = vsub.f32 0.0, %v1997
      %v2062 = vsub.f32 0.0, %v1998
      %v2063 = vsub.f32 0.0, %v1999
      %v2064 = vsub.f32 0.0, %v2000
      %v2065 = vsub.f32 0.0, %v2001
      %v2066 = vsub.f32 0.0, %v2002
      %v2067 = vsub.f32 0.0, %v2003
      %v2068 = vsub.f32 0.0, %v2004
      %v2069 = vsub.f32 0.0, %v2005
      %v2070 = vsub.f32 0.0, %v2006
      %v2071 = vsel %vm2007, %v1975, %v2039
      %v2072 = vsel %vm2008, %v1976, %v2040
      %v2073 = vsel %vm2009, %v1977, %v2041
      %v2074 = vsel %vm2010, %v1978, %v2042
      %v2075 = vsel %vm2011, %v1979, %v2043
      %v2076 = vsel %vm2012, %v1980, %v2044
      %v2077 = vsel %vm2013, %v1981, %v2045
      %v2078 = vsel %vm2014, %v1982, %v2046
      %v2079 = vsel %vm2015, %v1983, %v2047
      %v2080 = vsel %vm2016, %v1984, %v2048
      %v2081 = vsel %vm2017, %v1985, %v2049
      %v2082 = vsel %vm2018, %v1986, %v2050
      %v2083 = vsel %vm2019, %v1987, %v2051
      %v2084 = vsel %vm2020, %v1988, %v2052
      %v2085 = vsel %vm2021, %v1989, %v2053
      %v2086 = vsel %vm2022, %v1990, %v2054
      %v2087 = vsel %vm2023, %v1991, %v2055
      %v2088 = vsel %vm2024, %v1992, %v2056
      %v2089 = vsel %vm2025, %v1993, %v2057
      %v2090 = vsel %vm2026, %v1994, %v2058
      %v2091 = vsel %vm2027, %v1995, %v2059
      %v2092 = vsel %vm2028, %v1996, %v2060
      %v2093 = vsel %vm2029, %v1997, %v2061
      %v2094 = vsel %vm2030, %v1998, %v2062
      %v2095 = vsel %vm2031, %v1999, %v2063
      %v2096 = vsel %vm2032, %v2000, %v2064
      %v2097 = vsel %vm2033, %v2001, %v2065
      %v2098 = vsel %vm2034, %v2002, %v2066
      %v2099 = vsel %vm2035, %v2003, %v2067
      %v2100 = vsel %vm2036, %v2004, %v2068
      %v2101 = vsel %vm2037, %v2005, %v2069
      %v2102 = vsel %vm2038, %v2006, %v2070
      %v2103 = vadd.f32 %v2071, 1.0
      %v2104 = vadd.f32 %v2072, 1.0
      %v2105 = vadd.f32 %v2073, 1.0
      %v2106 = vadd.f32 %v2074, 1.0
      %v2107 = vadd.f32 %v2075, 1.0
      %v2108 = vadd.f32 %v2076, 1.0
      %v2109 = vadd.f32 %v2077, 1.0
      %v2110 = vadd.f32 %v2078, 1.0
      %v2111 = vadd.f32 %v2079, 1.0
      %v2112 = vadd.f32 %v2080, 1.0
      %v2113 = vadd.f32 %v2081, 1.0
      %v2114 = vadd.f32 %v2082, 1.0
      %v2115 = vadd.f32 %v2083, 1.0
      %v2116 = vadd.f32 %v2084, 1.0
      %v2117 = vadd.f32 %v2085, 1.0
      %v2118 = vadd.f32 %v2086, 1.0
      %v2119 = vadd.f32 %v2087, 1.0
      %v2120 = vadd.f32 %v2088, 1.0
      %v2121 = vadd.f32 %v2089, 1.0
      %v2122 = vadd.f32 %v2090, 1.0
      %v2123 = vadd.f32 %v2091, 1.0
      %v2124 = vadd.f32 %v2092, 1.0
      %v2125 = vadd.f32 %v2093, 1.0
      %v2126 = vadd.f32 %v2094, 1.0
      %v2127 = vadd.f32 %v2095, 1.0
      %v2128 = vadd.f32 %v2096, 1.0
      %v2129 = vadd.f32 %v2097, 1.0
      %v2130 = vadd.f32 %v2098, 1.0
      %v2131 = vadd.f32 %v2099, 1.0
      %v2132 = vadd.f32 %v2100, 1.0
      %v2133 = vadd.f32 %v2101, 1.0
      %v2134 = vadd.f32 %v2102, 1.0
      %v2135 = vmul.f32 %v1303, %v2103
      %v2136 = vmul.f32 %v1304, %v2104
      %v2137 = vmul.f32 %v1305, %v2105
      %v2138 = vmul.f32 %v1306, %v2106
      %v2139 = vmul.f32 %v1307, %v2107
      %v2140 = vmul.f32 %v1308, %v2108
      %v2141 = vmul.f32 %v1309, %v2109
      %v2142 = vmul.f32 %v1310, %v2110
      %v2143 = vmul.f32 %v1311, %v2111
      %v2144 = vmul.f32 %v1312, %v2112
      %v2145 = vmul.f32 %v1313, %v2113
      %v2146 = vmul.f32 %v1314, %v2114
      %v2147 = vmul.f32 %v1315, %v2115
      %v2148 = vmul.f32 %v1316, %v2116
      %v2149 = vmul.f32 %v1317, %v2117
      %v2150 = vmul.f32 %v1318, %v2118
      %v2151 = vmul.f32 %v1319, %v2119
      %v2152 = vmul.f32 %v1320, %v2120
      %v2153 = vmul.f32 %v1321, %v2121
      %v2154 = vmul.f32 %v1322, %v2122
      %v2155 = vmul.f32 %v1323, %v2123
      %v2156 = vmul.f32 %v1324, %v2124
      %v2157 = vmul.f32 %v1325, %v2125
      %v2158 = vmul.f32 %v1326, %v2126
      %v2159 = vmul.f32 %v1327, %v2127
      %v2160 = vmul.f32 %v1328, %v2128
      %v2161 = vmul.f32 %v1329, %v2129
      %v2162 = vmul.f32 %v1330, %v2130
      %v2163 = vmul.f32 %v1331, %v2131
      %v2164 = vmul.f32 %v1332, %v2132
      %v2165 = vmul.f32 %v1333, %v2133
      %v2166 = vmul.f32 %v1334, %v2134
      %vm2167 = vcmask 261120
      %2168 = vst.msk [vmem:[%s233] sm:$0xff] %vm2167, %v2135
      %2169 = vst.msk [vmem:[%s233 + $0x8] sm:$0xff] %vm2167, %v2136
      %2170 = vst.msk [vmem:[%s233 + $0x10] sm:$0xff] %vm2167, %v2137
      %2171 = vst.msk [vmem:[%s233 + $0x18] sm:$0xff] %vm2167, %v2138
      %2172 = vst.msk [vmem:[%s233 + $0x20] sm:$0xff] %vm2167, %v2139
      %2173 = vst.msk [vmem:[%s233 + $0x28] sm:$0xff] %vm2167, %v2140
      %2174 = vst.msk [vmem:[%s233 + $0x30] sm:$0xff] %vm2167, %v2141
      %2175 = vst.msk [vmem:[%s233 + $0x38] sm:$0xff] %vm2167, %v2142
      %2176 = vst.msk [vmem:[%s233 + $0x40] sm:$0xff] %vm2167, %v2143
      %2177 = vst.msk [vmem:[%s233 + $0x48] sm:$0xff] %vm2167, %v2144
      %2178 = vst.msk [vmem:[%s233 + $0x50] sm:$0xff] %vm2167, %v2145
      %2179 = vst.msk [vmem:[%s233 + $0x58] sm:$0xff] %vm2167, %v2146
      %2180 = vst.msk [vmem:[%s233 + $0x60] sm:$0xff] %vm2167, %v2147
      %2181 = vst.msk [vmem:[%s233 + $0x68] sm:$0xff] %vm2167, %v2148
      %2182 = vst.msk [vmem:[%s233 + $0x70] sm:$0xff] %vm2167, %v2149
      %2183 = vst.msk [vmem:[%s233 + $0x78] sm:$0xff] %vm2167, %v2150
      %2184 = vst.msk [vmem:[%s233 + $0x80] sm:$0xff] %vm2167, %v2151
      %2185 = vst.msk [vmem:[%s233 + $0x88] sm:$0xff] %vm2167, %v2152
      %2186 = vst.msk [vmem:[%s233 + $0x90] sm:$0xff] %vm2167, %v2153
      %2187 = vst.msk [vmem:[%s233 + $0x98] sm:$0xff] %vm2167, %v2154
      %2188 = vst.msk [vmem:[%s233 + $0xa0] sm:$0xff] %vm2167, %v2155
      %2189 = vst.msk [vmem:[%s233 + $0xa8] sm:$0xff] %vm2167, %v2156
      %2190 = vst.msk [vmem:[%s233 + $0xb0] sm:$0xff] %vm2167, %v2157
      %2191 = vst.msk [vmem:[%s233 + $0xb8] sm:$0xff] %vm2167, %v2158
      %2192 = vst.msk [vmem:[%s233 + $0xc0] sm:$0xff] %vm2167, %v2159
      %2193 = vst.msk [vmem:[%s233 + $0xc8] sm:$0xff] %vm2167, %v2160
      %2194 = vst.msk [vmem:[%s233 + $0xd0] sm:$0xff] %vm2167, %v2161
      %2195 = vst.msk [vmem:[%s233 + $0xd8] sm:$0xff] %vm2167, %v2162
      %2196 = vst.msk [vmem:[%s233 + $0xe0] sm:$0xff] %vm2167, %v2163
      %2197 = vst.msk [vmem:[%s233 + $0xe8] sm:$0xff] %vm2167, %v2164
      %2198 = vst.msk [vmem:[%s233 + $0xf0] sm:$0xff] %vm2167, %v2165
      %2199 = vst.msk [vmem:[%s233 + $0xf8] sm:$0xff] %vm2167, %v2166
      %s2200 = smul.u32 32, %s20
      %p2201 = scmp.lt.s32.totalorder %s19, 1
      %s2202 = scalar_select %p2201, %s19, 1
      %p2203 = scmp.lt.s32.totalorder %s2200, 31
      %s2204 = scalar_select %p2203, %s2200, 31
      %s2205 = smul.addr %s2202, 32
      %s2206 = sadd.s32 %s2204, %s2205
      %s2207 = smul.addr %s2206, 8
      %s2208 = scalar_lea.vmem %s4, %s2207
      // Predicated region
      $region37: #{_lambda_.2} parent=35 // pred_check
        %p2209 = pneg %p138
      $region38: #{_lambda_.2} parent=35 // pred_check_branch
        %2211 = sbr.rel (%p2209) target = $region40
      $region39: #{_lambda_.2} parent=35 // pred_region
        %s2212 = smul.u32 32, %s20
      $region40: #{_lambda_.2} parent=35 // pred_fallthru
        _
    $region36: #{_lambda_.2} parent=5 // pred_fallthru
      _
    %p2213 = scmp.le.s32.totalorder 2, %s10
    // Predicated region
    $region41: #{_lambda_.2} parent=5 // pred_check
      %p2214 = pneg %p2213
    $region42: #{_lambda_.2} parent=5 // pred_check_branch
      %2216 = sbr.rel (%p2214) target = $region44
    $region43: #{_lambda_.2} parent=5 // pred_region
      %s2217 = ssub.s32 %s10, 2
      // Predicated region
      $region45: #{_lambda_.2} parent=43 // pred_check
        %p2218 = pneg %p144
      $region46: #{_lambda_.2} parent=43 // pred_check_branch
        %2220 = sbr.rel (%p2218) target = $region48
      $region47: #{_lambda_.2} parent=43 // pred_region
        %s2221 = smul.u32 32, %s22
        %p2222 = scmp.lt.s32.totalorder %s21, 1
        %s2223 = scalar_select %p2222, %s21, 1
        %p2224 = scmp.lt.s32.totalorder %s2221, 31
        %s2225 = scalar_select %p2224, %s2221, 31
        %s2226 = smul.addr %s2223, 32
        %s2227 = sadd.s32 %s2225, %s2226
        %s2228 = smul.addr %s2227, 8
        %s2229 = scalar_lea.vmem %s4, %s2228
      $region48: #{_lambda_.2} parent=43 // pred_fallthru
        _
    $region44: #{_lambda_.2} parent=5 // pred_fallthru
      _
  $region6: #{_lambda_.2} parent=0 // loop_footer
    %s14 = sadd.s32 1, %s10
  $region7: #{_lambda_.2} parent=0 // loop_footer_branch
    %9 = sbr.rel target = $region3
  $region8: #{_lambda_.2} parent=0 // loop_exit
    _

</llo_original>
